<compile_context>
chip_gen: v6e
topology: v6e:2x2x1
jax: 0.10.0
libtpu: 0.0.40
codegen_flags: <defaults>
</compile_context>

<pallas_src>
import jax
import jax.numpy as jnp
from jax.experimental import pallas as pl
from jax.experimental.pallas import tpu as pltpu

_LANE = 128
_BUFFERED_PARAMS_OK = None  # cached: does this JAX accept pl.Buffered(1) on input specs?


def _round_up(x, m):
    return ((x + m - 1) // m) * m


def _pad_feature_dim(d):
    """256-granular padding for wide dims (2x256 MXU on v6e/v7x), 128 (lane width)
    for small dims to avoid doubling wasted FLOPs."""
    g = 256 if d >= 256 else _LANE
    return _round_up(d, g)


def _vmem_budget_bytes():
    """~75% of physical VMEM (headroom for Mosaic internal scratch).
    v7x (64 MiB) -> ~48 MiB; v5e/v6e (128 MiB) -> ~96 MiB."""
    try:
        cap = int(pltpu.get_tpu_info().vmem_capacity_bytes)
    except Exception:
        cap = 64 * 2**20  # conservative fallback
    return (cap * 3) // 4


def _make_mlp_kernel(n_layers, use_layer_norm, mxu_dtype, input_dim, eps=1e-5):
    """Fused kernel: [optional LayerNorm] -> (Linear, ReLU)^(n-1) -> Linear."""

    def kernel(*refs):
        # refs layout:
        #   x_ref,
        #   [gamma_ref, beta_ref]          (only if use_layer_norm, shape (1, d_in_p)),
        #   (w_ref, b_ref) * n_layers,     (w: [d_in_p, d_out_p] mxu_dtype, b: (1, d_out_p) f32)
        #   o_ref                          (rows_tile, output_dim)  -- UNpadded
        idx = 0
        x_ref = refs[idx]; idx += 1
        if use_layer_norm:
            gamma_ref = refs[idx]; beta_ref = refs[idx + 1]; idx += 2
        wb_refs = refs[idx: idx + 2 * n_layers]
        o_ref = refs[idx + 2 * n_layers]

        if use_layer_norm:
            # LayerNorm epilogue in f32 (v5e has no bf16 VPU/EUP path).
            xf = x_ref[...].astype(jnp.float32)
            d_in_p = xf.shape[-1]
            if d_in_p != input_dim:
                # Feature dim was zero-padded to a lane multiple: normalize over
                # the original `input_dim` lanes only (static mask).
                lane = jax.lax.broadcasted_iota(jnp.int32, xf.shape, dimension=1)
                valid = lane < input_dim
                mean = jnp.sum(xf, axis=-1, keepdims=True) * (1.0 / input_dim)
                centered = jnp.where(valid, xf - mean, 0.0)
            else:
                mean = jnp.sum(xf, axis=-1, keepdims=True) * (1.0 / input_dim)
                centered = xf - mean
            var = jnp.sum(centered * centered, axis=-1, keepdims=True) * (1.0 / input_dim)
            inv = jax.lax.rsqrt(var + eps)
            h = (centered * inv) * gamma_ref[...] + beta_ref[...]
            h = h.astype(mxu_dtype)
        else:
            # No f32 detour on the no-LN path: cast straight to the MXU dtype.
            h = x_ref[...].astype(mxu_dtype)

        for layer in range(n_layers):
            w_ref = wb_refs[2 * layer]
            b_ref = wb_refs[2 * layer + 1]
            # MXU-dtype operands, f32 accumulation.
            acc = jnp.dot(h, w_ref[...], preferred_element_type=jnp.float32)
            acc = acc + b_ref[...]                       # bias add in f32
            if layer < n_layers - 1:
                # Cast the carried activation to the MXU dtype immediately so the
                # inter-layer value (and any spill) is half-width.
                h = jnp.maximum(acc, 0.0).astype(mxu_dtype)
            else:
                h = acc

        o_ref[...] = h.astype(o_ref.dtype)

    return kernel


def prepare_mlp_params(params, *, n_layers, use_layer_norm, mxu_dtype=jnp.bfloat16):
    """One-time param prep: pad input/hidden feature dims (lane/MXU friendly),
    leave the OUTPUT dim unpadded, cast weights to the MXU dtype, reshape
    1-D vectors to (1, d) lane-major tiles."""
    weights, biases = params["weights"], params["biases"]
    input_dim = weights[0].shape[0]
    dims = [w.shape[0] for w in weights] + [weights[-1].shape[1]]
    output_dim = dims[-1]
    pdims = ([_round_up(input_dim, _LANE)]
             + [_pad_feature_dim(d) for d in dims[1:-1]]
             + [output_dim])  # output dim NOT padded: kernel writes final result directly

    pw, pb = [], []
    for i in range(n_layers):
        w, b = weights[i], biases[i]
        w = jnp.pad(w, ((0, pdims[i] - w.shape[0]), (0, pdims[i + 1] - w.shape[1])))
        pw.append(w.astype(mxu_dtype))
        b = jnp.pad(b, (0, pdims[i + 1] - b.shape[0]))
        pb.append(b.reshape(1, -1).astype(jnp.float32))

    prepared = {"weights": pw, "biases": pb, "dims": dims, "pdims": pdims}
    if use_layer_norm:
        g = jnp.pad(params["ln_gamma"], (0, pdims[0] - input_dim))
        bt = jnp.pad(params["ln_beta"], (0, pdims[0] - input_dim))
        prepared["ln_gamma"] = g.reshape(1, -1).astype(jnp.float32)
        prepared["ln_beta"] = bt.reshape(1, -1).astype(jnp.float32)
    return prepared


def mlp_forward(x, prepared, *, n_layers, use_layer_norm,
                row_tile=None, mxu_dtype=jnp.bfloat16, io_dtype=None):
    """Applies the MLP over the last axis of x. `prepared` from prepare_mlp_params.
    io_dtype (e.g. jnp.bfloat16) optionally halves activation HBM traffic."""
    global _BUFFERED_PARAMS_OK

    orig_shape = x.shape
    input_dim = orig_shape[-1]
    dims, pdims = prepared["dims"], prepared["pdims"]
    assert input_dim == dims[0], (input_dim, dims)
    output_dim = dims[-1]
    d_in_p = pdims[0]

    rows = 1
    for d in orig_shape[:-1]:
        rows *= d

    x2 = x.reshape(rows, input_dim)
    if io_dtype is not None and x2.dtype != jnp.dtype(io_dtype):
        x2 = x2.astype(io_dtype)
    if d_in_p != input_dim:
        # Pad the feature dim once so LN / the first matmul run lane-dense.
        x2 = jnp.pad(x2, ((0, 0), (0, d_in_p - input_dim)))
    out_dtype = jnp.dtype(io_dtype) if io_dtype is not None else x.dtype

    x_bytes = jnp.dtype(x2.dtype).itemsize
    out_bytes = jnp.dtype(out_dtype).itemsize
    mxu_bytes = jnp.dtype(mxu_dtype).itemsize

    # -------- parameter bytes (weights + biases + LN affine) --------
    param_list = []
    if use_layer_norm:
        param_list += [prepared["ln_gamma"], prepared["ln_beta"]]
    for w, b in zip(prepared["weights"], prepared["biases"]):
        param_list += [w, b]
    param_bytes = sum(int(p.size) * p.dtype.itemsize for p in param_list)

    # -------- generation-aware row_tile / VMEM budget --------
    budget = _vmem_budget_bytes()
    # per-row VMEM: double-buffered in/out tiles + per-layer activation
    # temporaries (f32 dot output + half-width carry).
    act_row = sum(pdims[l + 1] * (4 + mxu_bytes) for l in range(n_layers))
    per_row = 2 * d_in_p * x_bytes + 2 * output_dim * out_bytes + act_row
    avail = budget - 2 * param_bytes - (4 << 20)  # conservative: double-buffered params
    if row_tile is None:
        row_tile = avail // per_row if per_row > 0 else 512
        row_tile = max(8, min(512, int(row_tile)))
    row_tile = max(8, (int(row_tile) // 8) * 8)
    row_tile = min(row_tile, _round_up(rows, 8))
    if rows > 8:
        # Keep >= 2 grid blocks so the parallel row axis can shard across the
        # 2 TensorCores on v7x and the pipeline has something to overlap.
        row_tile = max(8, min(row_tile, _round_up(-(-rows // 2), 8)))

    grid = (pl.cdiv(rows, row_tile),)  # ragged last block handled by Pallas (masked writes)

    kernel = _make_mlp_kernel(n_layers, use_layer_norm, mxu_dtype, input_dim)

    flops = 2 * rows * sum(pdims[i] * pdims[i + 1] for i in range(n_layers))
    cost = pl.CostEstimate(
        flops=int(flops),
        transcendentals=int(rows if use_layer_norm else 0),
        bytes_accessed=int(int(x2.size) * x_bytes + param_bytes
                           + rows * output_dim * out_bytes))

    def run(single_buffer_params):
        def param_spec(shape):
            if single_buffer_params:
                # Grid-invariant operand: one resident copy, no wasted double buffer.
                return pl.BlockSpec(shape, lambda i: (0,) * len(shape),
                                    pipeline_mode=pl.Buffered(1))
            return pl.BlockSpec(shape, lambda i: (0,) * len(shape))

        operands = [x2]
        in_specs = [pl.BlockSpec((row_tile, d_in_p), lambda i: (i, 0))]
        if use_layer_norm:
            operands += [prepared["ln_gamma"], prepared["ln_beta"]]
            in_specs += [param_spec((1, d_in_p)), param_spec((1, d_in_p))]
        for w, b in zip(prepared["weights"], prepared["biases"]):
            operands += [w, b]
            in_specs += [param_spec(w.shape), param_spec(b.shape)]

        return pl.pallas_call(
            kernel,
            out_shape=jax.ShapeDtypeStruct((rows, output_dim), out_dtype),
            grid=grid,
            in_specs=in_specs,
            out_specs=pl.BlockSpec((row_tile, output_dim), lambda i: (i, 0)),
            compiler_params=pltpu.CompilerParams(
                dimension_semantics=("parallel",),
                vmem_limit_bytes=int(budget)),
            cost_estimate=cost,
        )(*operands)

    if _BUFFERED_PARAMS_OK is None:
        try:
            out = jax.block_until_ready(run(True))
            _BUFFERED_PARAMS_OK = True
        except Exception:
            # This JAX build rejects Buffered(1) input specs; fall back to the
            # default (double-buffered) params path.
            _BUFFERED_PARAMS_OK = False
            out = run(False)
    else:
        out = run(_BUFFERED_PARAMS_OK)

    return out.reshape(*orig_shape[:-1], output_dim)


def init_mlp_params(key, input_dim, hidden_dim, output_dim, n_layers,
                    use_layer_norm=False, dtype=jnp.float32):
    """Deterministic synthetic init (PyTorch-like uniform ranges); weights [d_in, d_out]."""
    dims = [input_dim] + [hidden_dim] * (n_layers - 1) + [output_dim]
    weights, biases = [], []
    for i in range(n_layers):
        key, kw, kb = jax.random.split(key, 3)
        bound = 1.0 / (dims[i] ** 0.5)
        w = jax.random.uniform(kw, (dims[i], dims[i + 1]), dtype, minval=-bound, maxval=bound)
        b = jax.random.uniform(kb, (dims[i + 1],), dtype, minval=-bound, maxval=bound)
        weights.append(w)
        biases.append(b)
    params = {"weights": weights, "biases": biases}
    if use_layer_norm:
        params["ln_gamma"] = jnp.ones((input_dim,), dtype)
        params["ln_beta"] = jnp.zeros((input_dim,), dtype)
    return params


def _reference_mlp(x, params, *, n_layers, use_layer_norm, eps=1e-5):
    h = x.astype(jnp.float32)
    if use_layer_norm:
        mean = jnp.mean(h, axis=-1, keepdims=True)
        var = jnp.mean((h - mean) ** 2, axis=-1, keepdims=True)
        h = (h - mean) * jax.lax.rsqrt(var + eps)
        h = h * params["ln_gamma"] + params["ln_beta"]
    for i in range(n_layers):
        h = h @ params["weights"][i] + params["biases"][i]
        if i < n_layers - 1:
            h = jnp.maximum(h, 0.0)
    return h.astype(jnp.float32)


if __name__ == "__main__":
    key = jax.random.PRNGKey(0)

    # ---- Config A: LayerNorm, ragged rows (154), input_dim not a lane multiple
    # (exercises masked-LN / padded-feature path), tiny output written unpadded.
    batch, seq = 2, 77
    input_dim, hidden_dim, output_dim, n_layers = 16, 32, 8, 3
    use_layer_norm = True

    key, kx, kp = jax.random.split(key, 3)
    x = jax.random.normal(kx, (batch, seq, input_dim), jnp.float32)
    params = init_mlp_params(kp, input_dim, hidden_dim, output_dim, n_layers,
                             use_layer_norm=use_layer_norm)
    ref = _reference_mlp(x, params, n_layers=n_layers, use_layer_norm=use_layer_norm)

    # Fast path: bf16 MXU operands, f32 accumulation / epilogue, bf16 activation carry.
    prep_bf16 = prepare_mlp_params(params, n_layers=n_layers,
                                   use_layer_norm=use_layer_norm,
                                   mxu_dtype=jnp.bfloat16)
    out = mlp_forward(x, prep_bf16, n_layers=n_layers,
                      use_layer_norm=use_layer_norm, mxu_dtype=jnp.bfloat16)
    out = jax.block_until_ready(out)
    assert out.shape == (batch, seq, output_dim), out.shape
    assert jnp.allclose(out, ref, atol=3e-2, rtol=3e-2), \
        "bf16-MXU kernel mismatch vs f32 reference"

    # Structural-correctness check: same kernel with f32 MXU operands matches tightly.
    prep_f32 = prepare_mlp_params(params, n_layers=n_layers,
                                  use_layer_norm=use_layer_norm,
                                  mxu_dtype=jnp.float32)
    out32 = mlp_forward(x, prep_f32, n_layers=n_layers,
                        use_layer_norm=use_layer_norm, mxu_dtype=jnp.float32)
    out32 = jax.block_until_ready(out32)
    assert jnp.allclose(out32, ref, atol=1e-4, rtol=1e-4), \
        "f32 kernel mismatch vs reference"

    # ---- Config B: no LayerNorm, lane-aligned input, bf16 activation I/O
    # (memory-bound fast path), 2 layers.
    b_in, b_hidden, b_out, b_layers = 128, 64, 32, 2
    key, kx2, kp2 = jax.random.split(key, 3)
    x_b = jax.random.normal(kx2, (4, 33, b_in), jnp.float32)
    params_b = init_mlp_params(kp2, b_in, b_hidden, b_out, b_layers, use_layer_norm=False)
    ref_b = _reference_mlp(x_b, params_b, n_layers=b_layers, use_layer_norm=False)
    prep_b = prepare_mlp_params(params_b, n_layers=b_layers, use_layer_norm=False,
                                mxu_dtype=jnp.bfloat16)
    out_b = mlp_forward(x_b, prep_b, n_layers=b_layers, use_layer_norm=False,
                        mxu_dtype=jnp.bfloat16, io_dtype=jnp.bfloat16)
    out_b = jax.block_until_ready(out_b)
    assert out_b.shape == (4, 33, b_out), out_b.shape
    assert jnp.allclose(out_b.astype(jnp.float32), ref_b, atol=6e-2, rtol=6e-2), \
        "bf16-io kernel mismatch vs f32 reference"

    print("KERNEL_OK")
</pallas_src>

<mosaic_0001>
module attributes {stable_mosaic.version = 11 : i64} {
  func.func @kernel(%arg0: i32, %arg1: memref<80x128xf32, #tpu.memory_space<vmem>>, %arg2: memref<1x128xf32, #tpu.memory_space<vmem>>, %arg3: memref<1x128xf32, #tpu.memory_space<vmem>>, %arg4: memref<128x128xbf16, #tpu.memory_space<vmem>>, %arg5: memref<1x128xf32, #tpu.memory_space<vmem>>, %arg6: memref<128x128xbf16, #tpu.memory_space<vmem>>, %arg7: memref<1x128xf32, #tpu.memory_space<vmem>>, %arg8: memref<128x8xbf16, #tpu.memory_space<vmem>>, %arg9: memref<1x8xf32, #tpu.memory_space<vmem>>, %arg10: memref<80x8xf32, #tpu.memory_space<vmem>>) attributes {dimension_semantics = [#tpu.dimension_semantics<parallel>], iteration_bounds = array<i64: 2>, scalar_prefetch = 0 : i64, scratch_operands = 0 : i64, tpu.core_type = #tpu.core_type<tc>, window_params = [{transform_indices = @transform_0, window_bounds = array<i64: 80, 128>}, {pipeline_mode = #tpu.pipeline_mode<synchronous>, transform_indices = @transform_1, window_bounds = array<i64: 1, 128>}, {pipeline_mode = #tpu.pipeline_mode<synchronous>, transform_indices = @transform_2, window_bounds = array<i64: 1, 128>}, {pipeline_mode = #tpu.pipeline_mode<synchronous>, transform_indices = @transform_3, window_bounds = array<i64: 128, 128>}, {pipeline_mode = #tpu.pipeline_mode<synchronous>, transform_indices = @transform_4, window_bounds = array<i64: 1, 128>}, {pipeline_mode = #tpu.pipeline_mode<synchronous>, transform_indices = @transform_5, window_bounds = array<i64: 128, 128>}, {pipeline_mode = #tpu.pipeline_mode<synchronous>, transform_indices = @transform_6, window_bounds = array<i64: 1, 128>}, {pipeline_mode = #tpu.pipeline_mode<synchronous>, transform_indices = @transform_7, window_bounds = array<i64: 128, 8>}, {pipeline_mode = #tpu.pipeline_mode<synchronous>, transform_indices = @transform_8, window_bounds = array<i64: 1, 8>}, {transform_indices = @transform_9, window_bounds = array<i64: 80, 8>}]} {
    %c0 = arith.constant 0 : index
    %c0_0 = arith.constant 0 : index
    %0 = vector.load %arg1[%c0, %c0_0] : memref<80x128xf32, #tpu.memory_space<vmem>>, vector<80x128xf32>
    %1 = tpu.iota {dimensions = array<i32: 1>} : vector<80x128xi32>
    %c16_i32 = arith.constant 16 : i32
    %2 = vector.broadcast %c16_i32 : i32 to vector<80x128xi32>
    %3 = arith.cmpi slt, %1, %2 : vector<80x128xi32>
    %cst = arith.constant dense<0.000000e+00> : vector<80xf32>
    %4 = vector.multi_reduction <add>, %0, %cst [1] : vector<80x128xf32> to vector<80xf32>
    %5 = vector.shape_cast %4 : vector<80xf32> to vector<80x1xf32>
    %cst_1 = arith.constant 6.250000e-02 : f32
    %6 = vector.broadcast %cst_1 : f32 to vector<80x1xf32>
    %7 = arith.mulf %5, %6 : vector<80x1xf32>
    %8 = vector.broadcast %7 : vector<80x1xf32> to vector<80x128xf32>
    %9 = arith.subf %0, %8 : vector<80x128xf32>
    %cst_2 = arith.constant 0.000000e+00 : f32
    %10 = vector.broadcast %cst_2 : f32 to vector<80x128xf32>
    %11 = arith.select %3, %9, %10 : vector<80x128xi1>, vector<80x128xf32>
    %12 = arith.mulf %11, %11 : vector<80x128xf32>
    %cst_3 = arith.constant dense<0.000000e+00> : vector<80xf32>
    %13 = vector.multi_reduction <add>, %12, %cst_3 [1] : vector<80x128xf32> to vector<80xf32>
    %14 = vector.shape_cast %13 : vector<80xf32> to vector<80x1xf32>
    %cst_4 = arith.constant 6.250000e-02 : f32
    %15 = vector.broadcast %cst_4 : f32 to vector<80x1xf32>
    %16 = arith.mulf %14, %15 : vector<80x1xf32>
    %cst_5 = arith.constant 9.99999974E-6 : f32
    %17 = vector.broadcast %cst_5 : f32 to vector<80x1xf32>
    %18 = arith.addf %16, %17 : vector<80x1xf32>
    %19 = math.rsqrt %18 : vector<80x1xf32>
    %20 = vector.broadcast %19 : vector<80x1xf32> to vector<80x128xf32>
    %21 = arith.mulf %11, %20 : vector<80x128xf32>
    %c0_6 = arith.constant 0 : index
    %c0_7 = arith.constant 0 : index
    %22 = vector.load %arg2[%c0_6, %c0_7] : memref<1x128xf32, #tpu.memory_space<vmem>>, vector<1x128xf32>
    %23 = vector.broadcast %22 : vector<1x128xf32> to vector<80x128xf32>
    %24 = arith.mulf %21, %23 : vector<80x128xf32>
    %c0_8 = arith.constant 0 : index
    %c0_9 = arith.constant 0 : index
    %25 = vector.load %arg3[%c0_8, %c0_9] : memref<1x128xf32, #tpu.memory_space<vmem>>, vector<1x128xf32>
    %26 = vector.broadcast %25 : vector<1x128xf32> to vector<80x128xf32>
    %27 = arith.addf %24, %26 : vector<80x128xf32>
    %28 = arith.truncf %27 : vector<80x128xf32> to vector<80x128xbf16>
    %c0_10 = arith.constant 0 : index
    %c0_11 = arith.constant 0 : index
    %29 = vector.load %arg4[%c0_10, %c0_11] : memref<128x128xbf16, #tpu.memory_space<vmem>>, vector<128x128xbf16>
    %cst_12 = arith.constant dense<0.000000e+00> : vector<80x128xf32>
    %30 = tpu.matmul %28, %29, %cst_12 {dimension_numbers = #tpu.dot_dimension_numbers<[1], [0], [0], [1], [0, 0, 1, 1], [], []>} : vector<80x128xbf16>, vector<128x128xbf16>, vector<80x128xf32> -> vector<80x128xf32>
    %c0_13 = arith.constant 0 : index
    %c0_14 = arith.constant 0 : index
    %31 = vector.load %arg5[%c0_13, %c0_14] : memref<1x128xf32, #tpu.memory_space<vmem>>, vector<1x128xf32>
    %32 = vector.broadcast %31 : vector<1x128xf32> to vector<80x128xf32>
    %33 = arith.addf %30, %32 : vector<80x128xf32>
    %cst_15 = arith.constant 0.000000e+00 : f32
    %34 = vector.broadcast %cst_15 : f32 to vector<80x128xf32>
    %35 = arith.maximumf %33, %34 : vector<80x128xf32>
    %36 = arith.truncf %35 : vector<80x128xf32> to vector<80x128xbf16>
    %c0_16 = arith.constant 0 : index
    %c0_17 = arith.constant 0 : index
    %37 = vector.load %arg6[%c0_16, %c0_17] : memref<128x128xbf16, #tpu.memory_space<vmem>>, vector<128x128xbf16>
    %cst_18 = arith.constant dense<0.000000e+00> : vector<80x128xf32>
    %38 = tpu.matmul %36, %37, %cst_18 {dimension_numbers = #tpu.dot_dimension_numbers<[1], [0], [0], [1], [0, 0, 1, 1], [], []>} : vector<80x128xbf16>, vector<128x128xbf16>, vector<80x128xf32> -> vector<80x128xf32>
    %c0_19 = arith.constant 0 : index
    %c0_20 = arith.constant 0 : index
    %39 = vector.load %arg7[%c0_19, %c0_20] : memref<1x128xf32, #tpu.memory_space<vmem>>, vector<1x128xf32>
    %40 = vector.broadcast %39 : vector<1x128xf32> to vector<80x128xf32>
    %41 = arith.addf %38, %40 : vector<80x128xf32>
    %cst_21 = arith.constant 0.000000e+00 : f32
    %42 = vector.broadcast %cst_21 : f32 to vector<80x128xf32>
    %43 = arith.maximumf %41, %42 : vector<80x128xf32>
    %44 = arith.truncf %43 : vector<80x128xf32> to vector<80x128xbf16>
    %c0_22 = arith.constant 0 : index
    %c0_23 = arith.constant 0 : index
    %45 = vector.load %arg8[%c0_22, %c0_23] : memref<128x8xbf16, #tpu.memory_space<vmem>>, vector<128x8xbf16>
    %cst_24 = arith.constant dense<0.000000e+00> : vector<80x8xf32>
    %46 = tpu.matmul %44, %45, %cst_24 {dimension_numbers = #tpu.dot_dimension_numbers<[1], [0], [0], [1], [0, 0, 1, 1], [], []>} : vector<80x128xbf16>, vector<128x8xbf16>, vector<80x8xf32> -> vector<80x8xf32>
    %c0_25 = arith.constant 0 : index
    %c0_26 = arith.constant 0 : index
    %47 = vector.load %arg9[%c0_25, %c0_26] : memref<1x8xf32, #tpu.memory_space<vmem>>, vector<1x8xf32>
    %48 = vector.broadcast %47 : vector<1x8xf32> to vector<80x8xf32>
    %49 = arith.addf %46, %48 : vector<80x8xf32>
    %c0_27 = arith.constant 0 : index
    %c0_28 = arith.constant 0 : index
    %50 = vector.load %arg10[%c0_27, %c0_28] : memref<80x8xf32, #tpu.memory_space<vmem>>, vector<80x8xf32>
    tpu.vector_store %arg10[%c0_27, %c0_28], %49 {strides = array<i32>} : memref<80x8xf32, #tpu.memory_space<vmem>>, vector<80x8xf32>,
    return
  }
  func.func @transform_0(%arg0: i32) -> (i32, i32) {
    %c0_i32 = arith.constant 0 : i32
    %c0_i32_0 = arith.constant 0 : i32
    return %arg0, %c0_i32 : i32, i32
  }
  func.func @transform_1(%arg0: i32) -> (i32, i32) {
    %c0_i32 = arith.constant 0 : i32
    %c0_i32_0 = arith.constant 0 : i32
    %c0_i32_1 = arith.constant 0 : i32
    return %c0_i32, %c0_i32_0 : i32, i32
  }
  func.func @transform_2(%arg0: i32) -> (i32, i32) {
    %c0_i32 = arith.constant 0 : i32
    %c0_i32_0 = arith.constant 0 : i32
    %c0_i32_1 = arith.constant 0 : i32
    return %c0_i32, %c0_i32_0 : i32, i32
  }
  func.func @transform_3(%arg0: i32) -> (i32, i32) {
    %c0_i32 = arith.constant 0 : i32
    %c0_i32_0 = arith.constant 0 : i32
    %c0_i32_1 = arith.constant 0 : i32
    return %c0_i32, %c0_i32_0 : i32, i32
  }
  func.func @transform_4(%arg0: i32) -> (i32, i32) {
    %c0_i32 = arith.constant 0 : i32
    %c0_i32_0 = arith.constant 0 : i32
    %c0_i32_1 = arith.constant 0 : i32
    return %c0_i32, %c0_i32_0 : i32, i32
  }
  func.func @transform_5(%arg0: i32) -> (i32, i32) {
    %c0_i32 = arith.constant 0 : i32
    %c0_i32_0 = arith.constant 0 : i32
    %c0_i32_1 = arith.constant 0 : i32
    return %c0_i32, %c0_i32_0 : i32, i32
  }
  func.func @transform_6(%arg0: i32) -> (i32, i32) {
    %c0_i32 = arith.constant 0 : i32
    %c0_i32_0 = arith.constant 0 : i32
    %c0_i32_1 = arith.constant 0 : i32
    return %c0_i32, %c0_i32_0 : i32, i32
  }
  func.func @transform_7(%arg0: i32) -> (i32, i32) {
    %c0_i32 = arith.constant 0 : i32
    %c0_i32_0 = arith.constant 0 : i32
    %c0_i32_1 = arith.constant 0 : i32
    return %c0_i32, %c0_i32_0 : i32, i32
  }
  func.func @transform_8(%arg0: i32) -> (i32, i32) {
    %c0_i32 = arith.constant 0 : i32
    %c0_i32_0 = arith.constant 0 : i32
    %c0_i32_1 = arith.constant 0 : i32
    return %c0_i32, %c0_i32_0 : i32, i32
  }
  func.func @transform_9(%arg0: i32) -> (i32, i32) {
    %c0_i32 = arith.constant 0 : i32
    %c0_i32_0 = arith.constant 0 : i32
    return %arg0, %c0_i32 : i32, i32
  }
}

module attributes {stable_mosaic.version = 11 : i64} {
  func.func @kernel(%arg0: i32, %arg1: memref<80x128xf32, #tpu.memory_space<vmem>>, %arg2: memref<1x128xf32, #tpu.memory_space<vmem>>, %arg3: memref<1x128xf32, #tpu.memory_space<vmem>>, %arg4: memref<128x128xbf16, #tpu.memory_space<vmem>>, %arg5: memref<1x128xf32, #tpu.memory_space<vmem>>, %arg6: memref<128x128xbf16, #tpu.memory_space<vmem>>, %arg7: memref<1x128xf32, #tpu.memory_space<vmem>>, %arg8: memref<128x8xbf16, #tpu.memory_space<vmem>>, %arg9: memref<1x8xf32, #tpu.memory_space<vmem>>, %arg10: memref<80x8xf32, #tpu.memory_space<vmem>>) attributes {dimension_semantics = [#tpu.dimension_semantics<parallel>], iteration_bounds = array<i64: 2>, scalar_prefetch = 0 : i64, scratch_operands = 0 : i64, tpu.core_type = #tpu.core_type<tc>, window_params = [{transform_indices = @transform_0, window_bounds = array<i64: 80, 128>}, {pipeline_mode = #tpu.pipeline_mode<synchronous>, transform_indices = @transform_1, window_bounds = array<i64: 1, 128>}, {pipeline_mode = #tpu.pipeline_mode<synchronous>, transform_indices = @transform_2, window_bounds = array<i64: 1, 128>}, {pipeline_mode = #tpu.pipeline_mode<synchronous>, transform_indices = @transform_3, window_bounds = array<i64: 128, 128>}, {pipeline_mode = #tpu.pipeline_mode<synchronous>, transform_indices = @transform_4, window_bounds = array<i64: 1, 128>}, {pipeline_mode = #tpu.pipeline_mode<synchronous>, transform_indices = @transform_5, window_bounds = array<i64: 128, 128>}, {pipeline_mode = #tpu.pipeline_mode<synchronous>, transform_indices = @transform_6, window_bounds = array<i64: 1, 128>}, {pipeline_mode = #tpu.pipeline_mode<synchronous>, transform_indices = @transform_7, window_bounds = array<i64: 128, 8>}, {pipeline_mode = #tpu.pipeline_mode<synchronous>, transform_indices = @transform_8, window_bounds = array<i64: 1, 8>}, {transform_indices = @transform_9, window_bounds = array<i64: 80, 8>}]} {
    %c0 = arith.constant 0 : index
    %c0_0 = arith.constant 0 : index
    %0 = vector.load %arg1[%c0, %c0_0] : memref<80x128xf32, #tpu.memory_space<vmem>>, vector<80x128xf32>
    %1 = tpu.iota {dimensions = array<i32: 1>} : vector<80x128xi32>
    %c16_i32 = arith.constant 16 : i32
    %2 = vector.broadcast %c16_i32 : i32 to vector<80x128xi32>
    %3 = arith.cmpi slt, %1, %2 : vector<80x128xi32>
    %cst = arith.constant dense<0.000000e+00> : vector<80xf32>
    %4 = vector.multi_reduction <add>, %0, %cst [1] : vector<80x128xf32> to vector<80xf32>
    %5 = vector.shape_cast %4 : vector<80xf32> to vector<80x1xf32>
    %cst_1 = arith.constant 6.250000e-02 : f32
    %6 = vector.broadcast %cst_1 : f32 to vector<80x1xf32>
    %7 = arith.mulf %5, %6 : vector<80x1xf32>
    %8 = vector.broadcast %7 : vector<80x1xf32> to vector<80x128xf32>
    %9 = arith.subf %0, %8 : vector<80x128xf32>
    %cst_2 = arith.constant 0.000000e+00 : f32
    %10 = vector.broadcast %cst_2 : f32 to vector<80x128xf32>
    %11 = arith.select %3, %9, %10 : vector<80x128xi1>, vector<80x128xf32>
    %12 = arith.mulf %11, %11 : vector<80x128xf32>
    %cst_3 = arith.constant dense<0.000000e+00> : vector<80xf32>
    %13 = vector.multi_reduction <add>, %12, %cst_3 [1] : vector<80x128xf32> to vector<80xf32>
    %14 = vector.shape_cast %13 : vector<80xf32> to vector<80x1xf32>
    %cst_4 = arith.constant 6.250000e-02 : f32
    %15 = vector.broadcast %cst_4 : f32 to vector<80x1xf32>
    %16 = arith.mulf %14, %15 : vector<80x1xf32>
    %cst_5 = arith.constant 9.99999974E-6 : f32
    %17 = vector.broadcast %cst_5 : f32 to vector<80x1xf32>
    %18 = arith.addf %16, %17 : vector<80x1xf32>
    %19 = math.rsqrt %18 : vector<80x1xf32>
    %20 = vector.broadcast %19 : vector<80x1xf32> to vector<80x128xf32>
    %21 = arith.mulf %11, %20 : vector<80x128xf32>
    %c0_6 = arith.constant 0 : index
    %c0_7 = arith.constant 0 : index
    %22 = vector.load %arg2[%c0_6, %c0_7] : memref<1x128xf32, #tpu.memory_space<vmem>>, vector<1x128xf32>
    %23 = vector.broadcast %22 : vector<1x128xf32> to vector<80x128xf32>
    %24 = arith.mulf %21, %23 : vector<80x128xf32>
    %c0_8 = arith.constant 0 : index
    %c0_9 = arith.constant 0 : index
    %25 = vector.load %arg3[%c0_8, %c0_9] : memref<1x128xf32, #tpu.memory_space<vmem>>, vector<1x128xf32>
    %26 = vector.broadcast %25 : vector<1x128xf32> to vector<80x128xf32>
    %27 = arith.addf %24, %26 : vector<80x128xf32>
    %28 = arith.truncf %27 : vector<80x128xf32> to vector<80x128xbf16>
    %c0_10 = arith.constant 0 : index
    %c0_11 = arith.constant 0 : index
    %29 = vector.load %arg4[%c0_10, %c0_11] : memref<128x128xbf16, #tpu.memory_space<vmem>>, vector<128x128xbf16>
    %cst_12 = arith.constant dense<0.000000e+00> : vector<80x128xf32>
    %30 = tpu.matmul %28, %29, %cst_12 {dimension_numbers = #tpu.dot_dimension_numbers<[1], [0], [0], [1], [0, 0, 1, 1], [], []>} : vector<80x128xbf16>, vector<128x128xbf16>, vector<80x128xf32> -> vector<80x128xf32>
    %c0_13 = arith.constant 0 : index
    %c0_14 = arith.constant 0 : index
    %31 = vector.load %arg5[%c0_13, %c0_14] : memref<1x128xf32, #tpu.memory_space<vmem>>, vector<1x128xf32>
    %32 = vector.broadcast %31 : vector<1x128xf32> to vector<80x128xf32>
    %33 = arith.addf %30, %32 : vector<80x128xf32>
    %cst_15 = arith.constant 0.000000e+00 : f32
    %34 = vector.broadcast %cst_15 : f32 to vector<80x128xf32>
    %35 = arith.maximumf %33, %34 : vector<80x128xf32>
    %36 = arith.truncf %35 : vector<80x128xf32> to vector<80x128xbf16>
    %c0_16 = arith.constant 0 : index
    %c0_17 = arith.constant 0 : index
    %37 = vector.load %arg6[%c0_16, %c0_17] : memref<128x128xbf16, #tpu.memory_space<vmem>>, vector<128x128xbf16>
    %cst_18 = arith.constant dense<0.000000e+00> : vector<80x128xf32>
    %38 = tpu.matmul %36, %37, %cst_18 {dimension_numbers = #tpu.dot_dimension_numbers<[1], [0], [0], [1], [0, 0, 1, 1], [], []>} : vector<80x128xbf16>, vector<128x128xbf16>, vector<80x128xf32> -> vector<80x128xf32>
    %c0_19 = arith.constant 0 : index
    %c0_20 = arith.constant 0 : index
    %39 = vector.load %arg7[%c0_19, %c0_20] : memref<1x128xf32, #tpu.memory_space<vmem>>, vector<1x128xf32>
    %40 = vector.broadcast %39 : vector<1x128xf32> to vector<80x128xf32>
    %41 = arith.addf %38, %40 : vector<80x128xf32>
    %cst_21 = arith.constant 0.000000e+00 : f32
    %42 = vector.broadcast %cst_21 : f32 to vector<80x128xf32>
    %43 = arith.maximumf %41, %42 : vector<80x128xf32>
    %44 = arith.truncf %43 : vector<80x128xf32> to vector<80x128xbf16>
    %c0_22 = arith.constant 0 : index
    %c0_23 = arith.constant 0 : index
    %45 = vector.load %arg8[%c0_22, %c0_23] : memref<128x8xbf16, #tpu.memory_space<vmem>>, vector<128x8xbf16>
    %cst_24 = arith.constant dense<0.000000e+00> : vector<80x8xf32>
    %46 = tpu.matmul %44, %45, %cst_24 {dimension_numbers = #tpu.dot_dimension_numbers<[1], [0], [0], [1], [0, 0, 1, 1], [], []>} : vector<80x128xbf16>, vector<128x8xbf16>, vector<80x8xf32> -> vector<80x8xf32>
    %c0_25 = arith.constant 0 : index
    %c0_26 = arith.constant 0 : index
    %47 = vector.load %arg9[%c0_25, %c0_26] : memref<1x8xf32, #tpu.memory_space<vmem>>, vector<1x8xf32>
    %48 = vector.broadcast %47 : vector<1x8xf32> to vector<80x8xf32>
    %49 = arith.addf %46, %48 : vector<80x8xf32>
    %c0_27 = arith.constant 0 : index
    %c0_28 = arith.constant 0 : index
    %50 = vector.load %arg10[%c0_27, %c0_28] : memref<80x8xf32, #tpu.memory_space<vmem>>, vector<80x8xf32>
    tpu.vector_store %arg10[%c0_27, %c0_28], %49 {strides = array<i32>} : memref<80x8xf32, #tpu.memory_space<vmem>>, vector<80x8xf32>,
    return
  }
  func.func @transform_0(%arg0: i32) -> (i32, i32) {
    %c0_i32 = arith.constant 0 : i32
    %c0_i32_0 = arith.constant 0 : i32
    return %arg0, %c0_i32 : i32, i32
  }
  func.func @transform_1(%arg0: i32) -> (i32, i32) {
    %c0_i32 = arith.constant 0 : i32
    %c0_i32_0 = arith.constant 0 : i32
    %c0_i32_1 = arith.constant 0 : i32
    return %c0_i32, %c0_i32_0 : i32, i32
  }
  func.func @transform_2(%arg0: i32) -> (i32, i32) {
    %c0_i32 = arith.constant 0 : i32
    %c0_i32_0 = arith.constant 0 : i32
    %c0_i32_1 = arith.constant 0 : i32
    return %c0_i32, %c0_i32_0 : i32, i32
  }
  func.func @transform_3(%arg0: i32) -> (i32, i32) {
    %c0_i32 = arith.constant 0 : i32
    %c0_i32_0 = arith.constant 0 : i32
    %c0_i32_1 = arith.constant 0 : i32
    return %c0_i32, %c0_i32_0 : i32, i32
  }
  func.func @transform_4(%arg0: i32) -> (i32, i32) {
    %c0_i32 = arith.constant 0 : i32
    %c0_i32_0 = arith.constant 0 : i32
    %c0_i32_1 = arith.constant 0 : i32
    return %c0_i32, %c0_i32_0 : i32, i32
  }
  func.func @transform_5(%arg0: i32) -> (i32, i32) {
    %c0_i32 = arith.constant 0 : i32
    %c0_i32_0 = arith.constant 0 : i32
    %c0_i32_1 = arith.constant 0 : i32
    return %c0_i32, %c0_i32_0 : i32, i32
  }
  func.func @transform_6(%arg0: i32) -> (i32, i32) {
    %c0_i32 = arith.constant 0 : i32
    %c0_i32_0 = arith.constant 0 : i32
    %c0_i32_1 = arith.constant 0 : i32
    return %c0_i32, %c0_i32_0 : i32, i32
  }
  func.func @transform_7(%arg0: i32) -> (i32, i32) {
    %c0_i32 = arith.constant 0 : i32
    %c0_i32_0 = arith.constant 0 : i32
    %c0_i32_1 = arith.constant 0 : i32
    return %c0_i32, %c0_i32_0 : i32, i32
  }
  func.func @transform_8(%arg0: i32) -> (i32, i32) {
    %c0_i32 = arith.constant 0 : i32
    %c0_i32_0 = arith.constant 0 : i32
    %c0_i32_1 = arith.constant 0 : i32
    return %c0_i32, %c0_i32_0 : i32, i32
  }
  func.func @transform_9(%arg0: i32) -> (i32, i32) {
    %c0_i32 = arith.constant 0 : i32
    %c0_i32_0 = arith.constant 0 : i32
    return %arg0, %c0_i32 : i32, i32
  }
}

</mosaic_0001>

<llo_original>
// kernel: tpu_custom_call.1
$region0: #{tpu_custom_call.1}
  #allocation0 [shape = 'u32[]', space=smem, size = 0x4, offset = 0x4, fixed_abs, tag = 'smem constant byte address 0x4 - core index']
  #allocation1 [shape = 'u32[144,128]{1,0:T(1,128)}', space=vmem, size = 0x12000, scoped, tag = 'internal scratch']
  %s0 = inlined_call_operand.hbm [shape: f32[154,128], index: 0, kind: input, shape index: {}]
  %s1 = inlined_call_operand.vmem [shape: f32[1,128], index: 1, kind: input, shape index: {}]
  %s2 = inlined_call_operand.vmem [shape: f32[1,128], index: 2, kind: input, shape index: {}]
  %s3 = inlined_call_operand.vmem [shape: bf16[128,128], index: 3, kind: input, shape index: {}]
  %s4 = inlined_call_operand.vmem [shape: f32[1,128], index: 4, kind: input, shape index: {}]
  %s5 = inlined_call_operand.hbm [shape: bf16[128,128], index: 5, kind: input, shape index: {}]
  %s6 = inlined_call_operand.vmem [shape: f32[1,128], index: 6, kind: input, shape index: {}]
  %s7 = inlined_call_operand.vmem [shape: bf16[128,8], index: 7, kind: input, shape index: {}]
  %s8 = inlined_call_operand.vmem [shape: f32[1,8], index: 8, kind: input, shape index: {}]
  %s9 = inlined_call_operand.vmem [shape: f32[154,8], index: 9, kind: output, shape index: {}]
  %s10 = sld [smem:[#allocation0]]
  $region77: #{tpu_custom_call.1} parent=0
    _
  %s12 = ssub.s32 1, %s10
  %s13 = scalar_select 0, %s12, %s10
  $region1: #{tpu_custom_call.1} parent=0
    #allocation2 [shape = 'u8[81920]{0}', space=vmem, size = 0x14000, scoped, tag = 'input window, operand 0']
    #allocation3 [shape = 's32[2]{0}', space=sflag, size = 0x8, scoped, tag = 'scoped memory for tpu_custom_call.1']
    #allocation4 [shape = 'u8[32768]{0}', space=vmem, size = 0x8000, scoped, tag = 'input window, operand 5, single buffered']
    #allocation5 [shape = 's32[1]{0}', space=sflag, size = 0x4, scoped, tag = 'scoped memory for tpu_custom_call.1']
    %14 = vsyncpa [#allocation3], 0
    %s15 = scalar_lea.sflag [#allocation3], 1
    %16 = vsyncpa %s15, 0
    %17 = vsyncpa [#allocation5], 0
    loop: start=0, step=1, limit=4
    $region2: #{tpu_custom_call.1} parent=1 // loop_pre_header
      _
    $region3: #{tpu_custom_call.1} parent=1 // loop_header
      %s19 = sphi 0, %s23
      %p20 = scmp.ge.s32.totalorder %s19, 4
      %s29 = sphi 0, %s31
      %s32 = sphi 0, %s29
      %s33 = sphi 0, %s32
      %s49 = sphi 0, %s33
      %s53 = sphi 0, %s53
      %s55 = sphi 0, %s53
      %s56 = sphi 0, %s55
      %s70 = sphi 0, %s56
      %s74 = sphi 0, %s74
      %s76 = sphi 0, %s74
      %s77 = sphi 0, %s76
      %s91 = sphi 0, %s77
      %s95 = sphi 0, %s95
      %s97 = sphi 0, %s95
      %s98 = sphi 0, %s97
      %s112 = sphi 0, %s98
      %s116 = sphi 0, %s116
      %s118 = sphi 0, %s116
      %s119 = sphi 0, %s118
      %s133 = sphi 0, %s119
      %s137 = sphi 0, %s137
      %s139 = sphi 0, %s137
      %s140 = sphi 0, %s139
      %s154 = sphi 0, %s140
      %s158 = sphi 0, %s158
      %s160 = sphi 0, %s158
      %s161 = sphi 0, %s160
      %s175 = sphi 0, %s161
      %s179 = sphi 0, %s179
      %s181 = sphi 0, %s179
      %s182 = sphi 0, %s181
      %s196 = sphi 0, %s182
      %s200 = sphi 0, %s200
      %s202 = sphi 0, %s200
      %s203 = sphi 0, %s202
      %s217 = sphi 0, %s203
      %s223 = sphi 0, %s225
      %s226 = sphi 0, %s223
      %s227 = sphi 0, %s226
      %s243 = sphi 0, %s227
    $region4: #{tpu_custom_call.1} parent=1 // loop_header_branch
      %22 = sbr.rel (%p20) target = $region8
    $region5: #{tpu_custom_call.1} parent=1 // loop_body
      %s24 = ssub.s32 %s19, 1
      %s25 = ssub.s32 %s19, 2
      %s26 = sadd.s32 %s19, 1
      %s27 = ssub.s32 %s19, %s26
      %p28 = scmp.eq.s32.totalorder %s27, 0
      %s30 = sadd.s32 %s29, 1
      %s31 = scalar_select %p28, %s29, %s30
      %p34 = pneg %p28
      %p35 = scmp.eq.s32.totalorder %s19, 1
      %p36 = por %p34, %p35
      %p37 = scmp.ne.s32.totalorder %s29, %s32
      %p38 = scmp.eq.s32.totalorder %s19, 0
      %p39 = por %p37, %p38
      %p40 = scmp.ne.s32.totalorder %s29, %s32
      %p41 = scmp.eq.s32.totalorder %s24, 1
      %p42 = por %p40, %p41
      %p43 = scmp.ne.s32.totalorder %s32, %s33
      %p44 = scmp.eq.s32.totalorder %s24, 0
      %p45 = por %p43, %p44
      %p46 = scmp.ne.s32.totalorder %s32, %s33
      %p47 = scmp.eq.s32.totalorder %s25, 1
      %p48 = por %p46, %p47
      %p50 = scmp.ne.s32.totalorder %s33, %s49
      %p51 = scmp.eq.s32.totalorder %s25, 0
      %p52 = por %p50, %p51
      %s54 = sadd.s32 %s53, 1
      %p57 = scmp.eq.s32.totalorder %s19, 1
      %p58 = scmp.ne.s32.totalorder %s53, %s55
      %p59 = scmp.eq.s32.totalorder %s19, 0
      %p60 = por %p58, %p59
      %p61 = scmp.ne.s32.totalorder %s53, %s55
      %p62 = scmp.eq.s32.totalorder %s24, 1
      %p63 = por %p61, %p62
      %p64 = scmp.ne.s32.totalorder %s55, %s56
      %p65 = scmp.eq.s32.totalorder %s24, 0
      %p66 = por %p64, %p65
      %p67 = scmp.ne.s32.totalorder %s55, %s56
      %p68 = scmp.eq.s32.totalorder %s25, 1
      %p69 = por %p67, %p68
      %p71 = scmp.ne.s32.totalorder %s56, %s70
      %p72 = scmp.eq.s32.totalorder %s25, 0
      %p73 = por %p71, %p72
      %s75 = sadd.s32 %s74, 1
      %p78 = scmp.eq.s32.totalorder %s19, 1
      %p79 = scmp.ne.s32.totalorder %s74, %s76
      %p80 = scmp.eq.s32.totalorder %s19, 0
      %p81 = por %p79, %p80
      %p82 = scmp.ne.s32.totalorder %s74, %s76
      %p83 = scmp.eq.s32.totalorder %s24, 1
      %p84 = por %p82, %p83
      %p85 = scmp.ne.s32.totalorder %s76, %s77
      %p86 = scmp.eq.s32.totalorder %s24, 0
      %p87 = por %p85, %p86
      %p88 = scmp.ne.s32.totalorder %s76, %s77
      %p89 = scmp.eq.s32.totalorder %s25, 1
      %p90 = por %p88, %p89
      %p92 = scmp.ne.s32.totalorder %s77, %s91
      %p93 = scmp.eq.s32.totalorder %s25, 0
      %p94 = por %p92, %p93
      %s96 = sadd.s32 %s95, 1
      %p99 = scmp.eq.s32.totalorder %s19, 1
      %p100 = scmp.ne.s32.totalorder %s95, %s97
      %p101 = scmp.eq.s32.totalorder %s19, 0
      %p102 = por %p100, %p101
      %p103 = scmp.ne.s32.totalorder %s95, %s97
      %p104 = scmp.eq.s32.totalorder %s24, 1
      %p105 = por %p103, %p104
      %p106 = scmp.ne.s32.totalorder %s97, %s98
      %p107 = scmp.eq.s32.totalorder %s24, 0
      %p108 = por %p106, %p107
      %p109 = scmp.ne.s32.totalorder %s97, %s98
      %p110 = scmp.eq.s32.totalorder %s25, 1
      %p111 = por %p109, %p110
      %p113 = scmp.ne.s32.totalorder %s98, %s112
      %p114 = scmp.eq.s32.totalorder %s25, 0
      %p115 = por %p113, %p114
      %s117 = sadd.s32 %s116, 1
      %p120 = scmp.eq.s32.totalorder %s19, 1
      %p121 = scmp.ne.s32.totalorder %s116, %s118
      %p122 = scmp.eq.s32.totalorder %s19, 0
      %p123 = por %p121, %p122
      %p124 = scmp.ne.s32.totalorder %s116, %s118
      %p125 = scmp.eq.s32.totalorder %s24, 1
      %p126 = por %p124, %p125
      %p127 = scmp.ne.s32.totalorder %s118, %s119
      %p128 = scmp.eq.s32.totalorder %s24, 0
      %p129 = por %p127, %p128
      %p130 = scmp.ne.s32.totalorder %s118, %s119
      %p131 = scmp.eq.s32.totalorder %s25, 1
      %p132 = por %p130, %p131
      %p134 = scmp.ne.s32.totalorder %s119, %s133
      %p135 = scmp.eq.s32.totalorder %s25, 0
      %p136 = por %p134, %p135
      %s138 = sadd.s32 %s137, 1
      %p141 = scmp.eq.s32.totalorder %s19, 1
      %p142 = scmp.ne.s32.totalorder %s137, %s139
      %p143 = scmp.eq.s32.totalorder %s19, 0
      %p144 = por %p142, %p143
      %p145 = scmp.ne.s32.totalorder %s137, %s139
      %p146 = scmp.eq.s32.totalorder %s24, 1
      %p147 = por %p145, %p146
      %p148 = scmp.ne.s32.totalorder %s139, %s140
      %p149 = scmp.eq.s32.totalorder %s24, 0
      %p150 = por %p148, %p149
      %p151 = scmp.ne.s32.totalorder %s139, %s140
      %p152 = scmp.eq.s32.totalorder %s25, 1
      %p153 = por %p151, %p152
      %p155 = scmp.ne.s32.totalorder %s140, %s154
      %p156 = scmp.eq.s32.totalorder %s25, 0
      %p157 = por %p155, %p156
      %s159 = sadd.s32 %s158, 1
      %p162 = scmp.eq.s32.totalorder %s19, 1
      %p163 = scmp.ne.s32.totalorder %s158, %s160
      %p164 = scmp.eq.s32.totalorder %s19, 0
      %p165 = por %p163, %p164
      %p166 = scmp.ne.s32.totalorder %s158, %s160
      %p167 = scmp.eq.s32.totalorder %s24, 1
      %p168 = por %p166, %p167
      %p169 = scmp.ne.s32.totalorder %s160, %s161
      %p170 = scmp.eq.s32.totalorder %s24, 0
      %p171 = por %p169, %p170
      %p172 = scmp.ne.s32.totalorder %s160, %s161
      %p173 = scmp.eq.s32.totalorder %s25, 1
      %p174 = por %p172, %p173
      %p176 = scmp.ne.s32.totalorder %s161, %s175
      %p177 = scmp.eq.s32.totalorder %s25, 0
      %p178 = por %p176, %p177
      %s180 = sadd.s32 %s179, 1
      %p183 = scmp.eq.s32.totalorder %s19, 1
      %p184 = scmp.ne.s32.totalorder %s179, %s181
      %p185 = scmp.eq.s32.totalorder %s19, 0
      %p186 = por %p184, %p185
      %p187 = scmp.ne.s32.totalorder %s179, %s181
      %p188 = scmp.eq.s32.totalorder %s24, 1
      %p189 = por %p187, %p188
      %p190 = scmp.ne.s32.totalorder %s181, %s182
      %p191 = scmp.eq.s32.totalorder %s24, 0
      %p192 = por %p190, %p191
      %p193 = scmp.ne.s32.totalorder %s181, %s182
      %p194 = scmp.eq.s32.totalorder %s25, 1
      %p195 = por %p193, %p194
      %p197 = scmp.ne.s32.totalorder %s182, %s196
      %p198 = scmp.eq.s32.totalorder %s25, 0
      %p199 = por %p197, %p198
      %s201 = sadd.s32 %s200, 1
      %p204 = scmp.eq.s32.totalorder %s19, 1
      %p205 = scmp.ne.s32.totalorder %s200, %s202
      %p206 = scmp.eq.s32.totalorder %s19, 0
      %p207 = por %p205, %p206
      %p208 = scmp.ne.s32.totalorder %s200, %s202
      %p209 = scmp.eq.s32.totalorder %s24, 1
      %p210 = por %p208, %p209
      %p211 = scmp.ne.s32.totalorder %s202, %s203
      %p212 = scmp.eq.s32.totalorder %s24, 0
      %p213 = por %p211, %p212
      %p214 = scmp.ne.s32.totalorder %s202, %s203
      %p215 = scmp.eq.s32.totalorder %s25, 1
      %p216 = por %p214, %p215
      %p218 = scmp.ne.s32.totalorder %s203, %s217
      %p219 = scmp.eq.s32.totalorder %s25, 0
      %p220 = por %p218, %p219
      %s221 = ssub.s32 %s19, %s26
      %p222 = scmp.eq.s32.totalorder %s221, 0
      %s224 = sadd.s32 %s223, 1
      %s225 = scalar_select %p222, %s223, %s224
      %p228 = pneg %p222
      %p229 = scmp.eq.s32.totalorder %s19, 1
      %p230 = por %p228, %p229
      %p231 = scmp.ne.s32.totalorder %s223, %s226
      %p232 = scmp.eq.s32.totalorder %s19, 0
      %p233 = por %p231, %p232
      %p234 = scmp.ne.s32.totalorder %s223, %s226
      %p235 = scmp.eq.s32.totalorder %s24, 1
      %p236 = por %p234, %p235
      %p237 = scmp.ne.s32.totalorder %s226, %s227
      %p238 = scmp.eq.s32.totalorder %s24, 0
      %p239 = por %p237, %p238
      %p240 = scmp.ne.s32.totalorder %s226, %s227
      %p241 = scmp.eq.s32.totalorder %s25, 1
      %p242 = por %p240, %p241
      %p244 = scmp.ne.s32.totalorder %s227, %s243
      %p245 = scmp.eq.s32.totalorder %s25, 0
      %p246 = por %p244, %p245
      %p247 = scmp.le.s32.totalorder 1, %s19
      %p248 = scmp.lt.s32.totalorder %s19, 3
      %p249 = pnand %p247, %p248
      %p250 = pneg %p249
      // Predicated region
      $region9: #{tpu_custom_call.1} parent=5 // pred_check
        _
      $region10: #{tpu_custom_call.1} parent=5 // pred_check_branch
        %252 = sbr.rel (%p249) target = $region12
      $region11: #{tpu_custom_call.1} parent=5 // pred_region
        %s253 = ssub.s32 %s19, 1
        // Predicated region
        $region13: #{tpu_custom_call.1} parent=11 // pred_check
          %p254 = pneg %p66
        $region14: #{tpu_custom_call.1} parent=11 // pred_check_branch
          %256 = sbr.rel (%p254) target = $region16
        $region15: #{tpu_custom_call.1} parent=11 // pred_region
          _
        $region16: #{tpu_custom_call.1} parent=11 // pred_fallthru
          _
        // Predicated region
        $region17: #{tpu_custom_call.1} parent=11 // pred_check
          %p257 = pneg %p87
        $region18: #{tpu_custom_call.1} parent=11 // pred_check_branch
          %259 = sbr.rel (%p257) target = $region20
        $region19: #{tpu_custom_call.1} parent=11 // pred_region
          _
        $region20: #{tpu_custom_call.1} parent=11 // pred_fallthru
          _
        // Predicated region
        $region21: #{tpu_custom_call.1} parent=11 // pred_check
          %p260 = pneg %p108
        $region22: #{tpu_custom_call.1} parent=11 // pred_check_branch
          %262 = sbr.rel (%p260) target = $region24
        $region23: #{tpu_custom_call.1} parent=11 // pred_region
          _
        $region24: #{tpu_custom_call.1} parent=11 // pred_fallthru
          _
        // Predicated region
        $region25: #{tpu_custom_call.1} parent=11 // pred_check
          %p263 = pneg %p129
        $region26: #{tpu_custom_call.1} parent=11 // pred_check_branch
          %265 = sbr.rel (%p263) target = $region28
        $region27: #{tpu_custom_call.1} parent=11 // pred_region
          _
        $region28: #{tpu_custom_call.1} parent=11 // pred_fallthru
          _
        // Predicated region
        $region29: #{tpu_custom_call.1} parent=11 // pred_check
          %p266 = pneg %p150
        $region30: #{tpu_custom_call.1} parent=11 // pred_check_branch
          %268 = sbr.rel (%p266) target = $region32
        $region31: #{tpu_custom_call.1} parent=11 // pred_region
          %s270 = ssub.s32 1024, 1024
          %271 = vsyncadd [#allocation5], %s270
          %s272 = sshll.u32 [#allocation4], 4
          %s273 = int_to_ptr.vmem [resolvable:$true] %s272
          %278 = dma.hbm_to_vmem [thread:$0]  %s5, 1024, %s273, [#allocation5], 64, 64, 4
        $region32: #{tpu_custom_call.1} parent=11 // pred_fallthru
          _
        // Predicated region
        $region33: #{tpu_custom_call.1} parent=11 // pred_check
          %p279 = pneg %p171
        $region34: #{tpu_custom_call.1} parent=11 // pred_check_branch
          %281 = sbr.rel (%p279) target = $region36
        $region35: #{tpu_custom_call.1} parent=11 // pred_region
          _
        $region36: #{tpu_custom_call.1} parent=11 // pred_fallthru
          _
        // Predicated region
        $region37: #{tpu_custom_call.1} parent=11 // pred_check
          %p282 = pneg %p192
        $region38: #{tpu_custom_call.1} parent=11 // pred_check_branch
          %284 = sbr.rel (%p282) target = $region40
        $region39: #{tpu_custom_call.1} parent=11 // pred_region
          _
        $region40: #{tpu_custom_call.1} parent=11 // pred_fallthru
          _
        // Predicated region
        $region41: #{tpu_custom_call.1} parent=11 // pred_check
          %p285 = pneg %p213
        $region42: #{tpu_custom_call.1} parent=11 // pred_check_branch
          %287 = sbr.rel (%p285) target = $region44
        $region43: #{tpu_custom_call.1} parent=11 // pred_region
          _
        $region44: #{tpu_custom_call.1} parent=11 // pred_fallthru
          _
      $region12: #{tpu_custom_call.1} parent=5 // pred_fallthru
        _
      %p288 = scmp.lt.s32.totalorder %s19, 2
      // Predicated region
      $region45: #{tpu_custom_call.1} parent=5 // pred_check
        %p289 = pneg %p288
      $region46: #{tpu_custom_call.1} parent=5 // pred_check_branch
        %291 = sbr.rel (%p289) target = $region48
      $region47: #{tpu_custom_call.1} parent=5 // pred_region
        // Predicated region
        $region49: #{tpu_custom_call.1} parent=47 // pred_check
          %p292 = pneg %p39
        $region50: #{tpu_custom_call.1} parent=47 // pred_check_branch
          %294 = sbr.rel (%p292) target = $region52
        $region51: #{tpu_custom_call.1} parent=47 // pred_region
          %s295 = sand.u32 %s29, 1
          %s296 = scalar_lea.sflag [#allocation3], %s295
          %s297 = sand.u32 %s29, 1
          %s298 = smul.addr %s297, 80
          %s299 = scalar_lea.vmem [#allocation2], %s298
          %s300 = smul.u32 10, %s19
          %s302 = ssub.s32 1280, 1280
          %303 = vsyncadd %s296, %s302
          %s304 = smul.addr %s300, 128
          %s305 = scalar_lea.hbm %s0, %s304
          %s306 = sshll.u32 %s299, 4
          %s307 = int_to_ptr.vmem [resolvable:$true] %s306
          %312 = dma.hbm_to_vmem [thread:$0]  %s305, 1280, %s307, %s296, 128, 128, 8
        $region52: #{tpu_custom_call.1} parent=47 // pred_fallthru
          _
      $region48: #{tpu_custom_call.1} parent=5 // pred_fallthru
        _
      %p313 = scmp.le.s32.totalorder 1, %s19
      %p314 = scmp.lt.s32.totalorder %s19, 3
      %p315 = pnand %p313, %p314
      %p316 = pneg %p315
      // Predicated region
      $region53: #{tpu_custom_call.1} parent=5 // pred_check
        _
      $region54: #{tpu_custom_call.1} parent=5 // pred_check_branch
        %318 = sbr.rel (%p315) target = $region56
      $region55: #{tpu_custom_call.1} parent=5 // pred_region
        %s319 = ssub.s32 %s19, 1
        %s320 = sand.u32 %s32, 1
        %s321 = scalar_lea.sflag [#allocation3], %s320
        %s322 = sand.u32 %s32, 1
        %s323 = smul.addr %s322, 80
        %s324 = scalar_lea.vmem [#allocation2], %s323
        // Predicated region
        $region57: #{tpu_custom_call.1} parent=55 // pred_check
          %p325 = pneg %p45
        $region58: #{tpu_custom_call.1} parent=55 // pred_check_branch
          %327 = sbr.rel (%p325) target = $region60
        $region59: #{tpu_custom_call.1} parent=55 // pred_region
          %328 = dma.done %s321, 1280
        $region60: #{tpu_custom_call.1} parent=55 // pred_fallthru
          _
        // Predicated region
        $region61: #{tpu_custom_call.1} parent=55 // pred_check
          %p329 = pneg %p150
        $region62: #{tpu_custom_call.1} parent=55 // pred_check_branch
          %331 = sbr.rel (%p329) target = $region64
        $region63: #{tpu_custom_call.1} parent=55 // pred_region
          %332 = dma.done [#allocation5], 1024
        $region64: #{tpu_custom_call.1} parent=55 // pred_fallthru
          _
        %s333 = sand.u32 %s32, 1
        %s334 = scalar_lea.sflag [#allocation3], %s333
        %s335 = sand.u32 %s32, 1
        %s336 = smul.addr %s335, 80
        %s337 = scalar_lea.vmem [#allocation2], %s336
        %p338 = pneg %p45
        %p339 = pneg %p42
        %p340 = pneg %p66
        %p341 = pneg %p63
        %p342 = pneg %p87
        %p343 = pneg %p84
        %p344 = pneg %p108
        %p345 = pneg %p105
        %p346 = pneg %p129
        %p347 = pneg %p126
        %p348 = pneg %p150
        %p349 = pneg %p147
        %p350 = pneg %p171
        %p351 = pneg %p168
        %p352 = pneg %p192
        %p353 = pneg %p189
        %p354 = pneg %p213
        %p355 = pneg %p210
        %p356 = pneg %p239
        %p357 = pneg %p236
        %s358 = smul.u32 10, %s24
        %p359 = scmp.lt.s32.totalorder %s358, 19
        %s360 = scalar_select %p359, %s358, 19
        %s361 = smul.addr %s360, 8
        %s362 = scalar_lea.vmem %s9, %s361
        %s363 = smul.u32 10, %s24
        %s364 = smul.u32 10, %s24
        %p365 = scmp.lt.s32.totalorder %s364, 19
        %s366 = scalar_select %p365, %s364, 19
        %s367 = smul.addr %s366, 8
        %s368 = scalar_lea.vmem %s9, %s367
        %s369 = smul.u32 10, %s24
        %v371 = vld [vmem:[%s324] sm:$0xff]
        %v372 = vld [vmem:[%s324 + $0x8] sm:$0xff]
        %v373 = vld [vmem:[%s324 + $0x10] sm:$0xff]
        %v374 = vld [vmem:[%s324 + $0x18] sm:$0xff]
        %v375 = vld [vmem:[%s324 + $0x20] sm:$0xff]
        %v376 = vld [vmem:[%s324 + $0x28] sm:$0xff]
        %v377 = vld [vmem:[%s324 + $0x30] sm:$0xff]
        %v378 = vld [vmem:[%s324 + $0x38] sm:$0xff]
        %v379 = vld [vmem:[%s324 + $0x40] sm:$0xff]
        %v380 = vld [vmem:[%s324 + $0x48] sm:$0xff]
        %v381 = vlaneseq
        %v382 = vand.u32 %v381, 127
        %vm383 = vcmp.lt.s32.totalorder %v382, 16
        %384 = vadd.xlane.f32.xlu0 %v371
        %v385 = vpop.xlane.xlu0 %384
        %386 = vadd.xlane.f32.xlu0 %v372
        %v387 = vpop.xlane.xlu0 %386
        %388 = vadd.xlane.f32.xlu0 %v373
        %v389 = vpop.xlane.xlu0 %388
        %390 = vadd.xlane.f32.xlu0 %v374
        %v391 = vpop.xlane.xlu0 %390
        %392 = vadd.xlane.f32.xlu0 %v375
        %v393 = vpop.xlane.xlu0 %392
        %394 = vadd.xlane.f32.xlu0 %v376
        %v395 = vpop.xlane.xlu0 %394
        %396 = vadd.xlane.f32.xlu0 %v377
        %v397 = vpop.xlane.xlu0 %396
        %398 = vadd.xlane.f32.xlu0 %v378
        %v399 = vpop.xlane.xlu0 %398
        %400 = vadd.xlane.f32.xlu0 %v379
        %v401 = vpop.xlane.xlu0 %400
        %402 = vadd.xlane.f32.xlu0 %v380
        %v403 = vpop.xlane.xlu0 %402
        %v404 = vmul.f32 %v385, 0.0625
        %v405 = vmul.f32 %v387, 0.0625
        %v406 = vmul.f32 %v389, 0.0625
        %v407 = vmul.f32 %v391, 0.0625
        %v408 = vmul.f32 %v393, 0.0625
        %v409 = vmul.f32 %v395, 0.0625
        %v410 = vmul.f32 %v397, 0.0625
        %v411 = vmul.f32 %v399, 0.0625
        %v412 = vmul.f32 %v401, 0.0625
        %v413 = vmul.f32 %v403, 0.0625
        %v414 = vsub.f32 %v371, %v404
        %v415 = vsub.f32 %v372, %v405
        %v416 = vsub.f32 %v373, %v406
        %v417 = vsub.f32 %v374, %v407
        %v418 = vsub.f32 %v375, %v408
        %v419 = vsub.f32 %v376, %v409
        %v420 = vsub.f32 %v377, %v410
        %v421 = vsub.f32 %v378, %v411
        %v422 = vsub.f32 %v379, %v412
        %v423 = vsub.f32 %v380, %v413
        %v424 = vsel %vm383, %v414, 0.0
        %v425 = vsel %vm383, %v415, 0.0
        %v426 = vsel %vm383, %v416, 0.0
        %v427 = vsel %vm383, %v417, 0.0
        %v428 = vsel %vm383, %v418, 0.0
        %v429 = vsel %vm383, %v419, 0.0
        %v430 = vsel %vm383, %v420, 0.0
        %v431 = vsel %vm383, %v421, 0.0
        %v432 = vsel %vm383, %v422, 0.0
        %v433 = vsel %vm383, %v423, 0.0
        %v434 = vmul.f32 %v424, %v424
        %v435 = vmul.f32 %v425, %v425
        %v436 = vmul.f32 %v426, %v426
        %v437 = vmul.f32 %v427, %v427
        %v438 = vmul.f32 %v428, %v428
        %v439 = vmul.f32 %v429, %v429
        %v440 = vmul.f32 %v430, %v430
        %v441 = vmul.f32 %v431, %v431
        %v442 = vmul.f32 %v432, %v432
        %v443 = vmul.f32 %v433, %v433
        %444 = vadd.xlane.f32.xlu0 %v434
        %v445 = vpop.xlane.xlu0 %444
        %446 = vadd.xlane.f32.xlu0 %v435
        %v447 = vpop.xlane.xlu0 %446
        %448 = vadd.xlane.f32.xlu0 %v436
        %v449 = vpop.xlane.xlu0 %448
        %450 = vadd.xlane.f32.xlu0 %v437
        %v451 = vpop.xlane.xlu0 %450
        %452 = vadd.xlane.f32.xlu0 %v438
        %v453 = vpop.xlane.xlu0 %452
        %454 = vadd.xlane.f32.xlu0 %v439
        %v455 = vpop.xlane.xlu0 %454
        %456 = vadd.xlane.f32.xlu0 %v440
        %v457 = vpop.xlane.xlu0 %456
        %458 = vadd.xlane.f32.xlu0 %v441
        %v459 = vpop.xlane.xlu0 %458
        %460 = vadd.xlane.f32.xlu0 %v442
        %v461 = vpop.xlane.xlu0 %460
        %462 = vadd.xlane.f32.xlu0 %v443
        %v463 = vpop.xlane.xlu0 %462
        %v464 = vmul.f32 %v445, 0.0625
        %v465 = vmul.f32 %v447, 0.0625
        %v466 = vmul.f32 %v449, 0.0625
        %v467 = vmul.f32 %v451, 0.0625
        %v468 = vmul.f32 %v453, 0.0625
        %v469 = vmul.f32 %v455, 0.0625
        %v470 = vmul.f32 %v457, 0.0625
        %v471 = vmul.f32 %v459, 0.0625
        %v472 = vmul.f32 %v461, 0.0625
        %v473 = vmul.f32 %v463, 0.0625
        %v474 = vadd.f32 %v464, 1e-05
        %v475 = vadd.f32 %v465, 1e-05
        %v476 = vadd.f32 %v466, 1e-05
        %v477 = vadd.f32 %v467, 1e-05
        %v478 = vadd.f32 %v468, 1e-05
        %v479 = vadd.f32 %v469, 1e-05
        %v480 = vadd.f32 %v470, 1e-05
        %v481 = vadd.f32 %v471, 1e-05
        %v482 = vadd.f32 %v472, 1e-05
        %v483 = vadd.f32 %v473, 1e-05
        %v484 = vrsqrt.pop %v474
        %v485 = vrsqrt.pop %v475
        %v486 = vrsqrt.pop %v476
        %v487 = vrsqrt.pop %v477
        %v488 = vrsqrt.pop %v478
        %v489 = vrsqrt.pop %v479
        %v490 = vrsqrt.pop %v480
        %v491 = vrsqrt.pop %v481
        %v492 = vrsqrt.pop %v482
        %v493 = vrsqrt.pop %v483
        %v494 = vmul.f32 %v424, %v484
        %v495 = vmul.f32 %v425, %v485
        %v496 = vmul.f32 %v426, %v486
        %v497 = vmul.f32 %v427, %v487
        %v498 = vmul.f32 %v428, %v488
        %v499 = vmul.f32 %v429, %v489
        %v500 = vmul.f32 %v430, %v490
        %v501 = vmul.f32 %v431, %v491
        %v502 = vmul.f32 %v432, %v492
        %v503 = vmul.f32 %v433, %v493
        %v504 = vld [vmem:[%s1] sm:$0x1]
        %v506 = vlaneseq
        %v507 = vshrl.u32 %v506, 7
        %v508 = vsub.s32 0, %v507
        %v509 = vrot.slane %v504, %v508
        %v511 = vmul.f32 %v494, %v509
        %v512 = vmul.f32 %v495, %v509
        %v513 = vmul.f32 %v496, %v509
        %v514 = vmul.f32 %v497, %v509
        %v515 = vmul.f32 %v498, %v509
        %v516 = vmul.f32 %v499, %v509
        %v517 = vmul.f32 %v500, %v509
        %v518 = vmul.f32 %v501, %v509
        %v519 = vmul.f32 %v502, %v509
        %v520 = vmul.f32 %v503, %v509
        %v521 = vld [vmem:[%s2] sm:$0x1]
        %v523 = vlaneseq
        %v524 = vshrl.u32 %v523, 7
        %v525 = vsub.s32 0, %v524
        %v526 = vrot.slane %v521, %v525
        %v528 = vadd.f32 %v511, %v526
        %v529 = vadd.f32 %v512, %v526
        %v530 = vadd.f32 %v513, %v526
        %v531 = vadd.f32 %v514, %v526
        %v532 = vadd.f32 %v515, %v526
        %v533 = vadd.f32 %v516, %v526
        %v534 = vadd.f32 %v517, %v526
        %v535 = vadd.f32 %v518, %v526
        %v536 = vadd.f32 %v519, %v526
        %v537 = vadd.f32 %v520, %v526
        %v538 = vpack.c.bf16 %v529, %v528
        %v539 = vpack.c.bf16 %v531, %v530
        %v540 = vpack.c.bf16 %v533, %v532
        %v541 = vpack.c.bf16 %v535, %v534
        %v542 = vpack.c.bf16 %v537, %v536
        %v543 = vld [vmem:[%s3] sm:$0xf]
        %v544 = vld [vmem:[%s3 + $0x4] sm:$0xf]
        %v545 = vld [vmem:[%s3 + $0x8] sm:$0xf]
        %v546 = vld [vmem:[%s3 + $0xc] sm:$0xf]
        %v547 = vld [vmem:[%s3 + $0x10] sm:$0xf]
        %v548 = vld [vmem:[%s3 + $0x14] sm:$0xf]
        %v549 = vld [vmem:[%s3 + $0x18] sm:$0xf]
        %v550 = vld [vmem:[%s3 + $0x1c] sm:$0xf]
        %v551 = vld [vmem:[%s3 + $0x20] sm:$0xf]
        %v552 = vld [vmem:[%s3 + $0x24] sm:$0xf]
        %v553 = vld [vmem:[%s3 + $0x28] sm:$0xf]
        %v554 = vld [vmem:[%s3 + $0x2c] sm:$0xf]
        %v555 = vld [vmem:[%s3 + $0x30] sm:$0xf]
        %v556 = vld [vmem:[%s3 + $0x34] sm:$0xf]
        %v557 = vld [vmem:[%s3 + $0x38] sm:$0xf]
        %v558 = vld [vmem:[%s3 + $0x3c] sm:$0xf]
        %v559 = vld [vmem:[%s4] sm:$0x1]
        %v561 = vlaneseq
        %v562 = vshrl.u32 %v561, 7
        %v563 = vsub.s32 0, %v562
        %v564 = vrot.slane %v559, %v563
        %v582 = vunpack.c.l.b16 %v543
        %v583 = vunpack.c.l.b16 %v544
        %v584 = vunpack.c.l.b16 %v545
        %v585 = vunpack.c.l.b16 %v546
        %v586 = vunpack.c.l.b16 %v547
        %v587 = vunpack.c.l.b16 %v548
        %v588 = vunpack.c.l.b16 %v549
        %v589 = vunpack.c.l.b16 %v550
        %v590 = vunpack.c.l.b16 %v551
        %v591 = vunpack.c.l.b16 %v552
        %v592 = vunpack.c.l.b16 %v553
        %v593 = vunpack.c.l.b16 %v554
        %v594 = vunpack.c.l.b16 %v555
        %v595 = vunpack.c.l.b16 %v556
        %v596 = vunpack.c.l.b16 %v557
        %v597 = vunpack.c.l.b16 %v558
        %v598 = vpack.c.b16 %v583, %v582
        %v599 = vpack.c.b16 %v585, %v584
        %v600 = vpack.c.b16 %v587, %v586
        %v601 = vpack.c.b16 %v589, %v588
        %v602 = vpack.c.b16 %v591, %v590
        %v603 = vpack.c.b16 %v593, %v592
        %v604 = vpack.c.b16 %v595, %v594
        %v605 = vpack.c.b16 %v597, %v596
        %614 = vmatprep.subr.bf16.mxu0 0
        %615 = vmatpush1.bf16.msra.mxu0 %v605
        %616 = vmatprep.subr.bf16.mxu0 0
        %617 = vmatpush1.bf16.msra.mxu0 %v604
        %618 = vmatprep.subr.bf16.mxu0 0
        %619 = vmatpush1.bf16.msra.mxu0 %v603
        %620 = vmatprep.subr.bf16.mxu0 0
        %621 = vmatpush1.bf16.msra.mxu0 %v602
        %622 = vmatprep.subr.bf16.mxu0 0
        %623 = vmatpush1.bf16.msra.mxu0 %v601
        %624 = vmatprep.subr.bf16.mxu0 0
        %625 = vmatpush1.bf16.msra.mxu0 %v600
        %626 = vmatprep.subr.bf16.mxu0 0
        %627 = vmatpush1.bf16.msra.mxu0 %v599
        %628 = vmatprep.subr.bf16.mxu0 0
        %629 = vmatpush1.bf16.msra.mxu0 %v598
        %630 = vmatprep.subr.bf16.mxu0 0
        %631 = vmatpush2.bf16.msra.mxu0 0
        %632 = vmatprep.subr.bf16.mxu0 0
        %633 = vmatpush2.bf16.msra.mxu0 0
        %634 = vmatprep.subr.bf16.mxu0 0
        %635 = vmatpush2.bf16.msra.mxu0 0
        %636 = vmatprep.subr.bf16.mxu0 0
        %637 = vmatpush2.bf16.msra.mxu0 0
        %638 = vmatprep.subr.bf16.mxu0 0
        %639 = vmatpush2.bf16.msra.mxu0 0
        %640 = vmatprep.subr.bf16.mxu0 0
        %641 = vmatpush2.bf16.msra.mxu0 0
        %642 = vmatprep.subr.bf16.mxu0 0
        %643 = vmatpush2.bf16.msra.mxu0 0
        %644 = vmatprep.subr.bf16.mxu0 0
        %645 = vmatpush2.bf16.msra.mxu0 0
        %646 = vmatprep.mubr.bf16.mxu0 0
        %647 = vmatmul.mubr.bf16.gmra.mxu0 %v538
        %v648 = vpop.f32.mrf.mxu0
        %v649 = vadd.f32 %v564, %v648
        %v650 = vpop.f32.mrf.mxu0
        %v651 = vpop.f32.mrf.mxu0
        %v652 = vadd.f32 %v564, %v651
        %v653 = vpop.f32.mrf.mxu0
        %654 = vmatprep.mubr.bf16.mxu0 0
        %655 = vmatmul.mubr.bf16.gmra.mxu0 %v539
        %v656 = vpop.f32.mrf.mxu0
        %v657 = vadd.f32 %v564, %v656
        %v658 = vpop.f32.mrf.mxu0
        %v659 = vpop.f32.mrf.mxu0
        %v660 = vadd.f32 %v564, %v659
        %v661 = vpop.f32.mrf.mxu0
        %662 = vmatprep.mubr.bf16.mxu0 0
        %663 = vmatmul.mubr.bf16.gmra.mxu0 %v540
        %v664 = vpop.f32.mrf.mxu0
        %v665 = vadd.f32 %v564, %v664
        %v666 = vpop.f32.mrf.mxu0
        %v667 = vpop.f32.mrf.mxu0
        %v668 = vadd.f32 %v564, %v667
        %v669 = vpop.f32.mrf.mxu0
        %670 = vmatprep.mubr.bf16.mxu0 0
        %671 = vmatmul.mubr.bf16.gmra.mxu0 %v541
        %v672 = vpop.f32.mrf.mxu0
        %v673 = vadd.f32 %v564, %v672
        %v674 = vpop.f32.mrf.mxu0
        %v675 = vpop.f32.mrf.mxu0
        %v676 = vadd.f32 %v564, %v675
        %v677 = vpop.f32.mrf.mxu0
        %678 = vmatprep.mubr.bf16.mxu0 0
        %679 = vmatmul.mubr.bf16.gmra.mxu0 %v542
        %v680 = vpop.f32.mrf.mxu0
        %v681 = vadd.f32 %v564, %v680
        %v682 = vpop.f32.mrf.mxu0
        %v683 = vpop.f32.mrf.mxu0
        %v684 = vadd.f32 %v564, %v683
        %v685 = vpop.f32.mrf.mxu0
        %686 = vdwg.mxu0
        %v687 = vmax.f32 %v649, 0.0
        %v688 = vmax.f32 %v652, 0.0
        %v689 = vmax.f32 %v657, 0.0
        %v690 = vmax.f32 %v660, 0.0
        %v691 = vmax.f32 %v665, 0.0
        %v692 = vmax.f32 %v668, 0.0
        %v693 = vmax.f32 %v673, 0.0
        %v694 = vmax.f32 %v676, 0.0
        %v695 = vmax.f32 %v681, 0.0
        %v696 = vmax.f32 %v684, 0.0
        %v697 = vpack.c.bf16 %v688, %v687
        %v698 = vpack.c.bf16 %v690, %v689
        %v699 = vpack.c.bf16 %v692, %v691
        %v700 = vpack.c.bf16 %v694, %v693
        %v701 = vpack.c.bf16 %v696, %v695
        %v702 = vld [vmem:[#allocation4] sm:$0xf]
        %v703 = vld [vmem:[#allocation4 + $0x4] sm:$0xf]
        %v704 = vld [vmem:[#allocation4 + $0x8] sm:$0xf]
        %v705 = vld [vmem:[#allocation4 + $0xc] sm:$0xf]
        %v706 = vld [vmem:[#allocation4 + $0x10] sm:$0xf]
        %v707 = vld [vmem:[#allocation4 + $0x14] sm:$0xf]
        %v708 = vld [vmem:[#allocation4 + $0x18] sm:$0xf]
        %v709 = vld [vmem:[#allocation4 + $0x1c] sm:$0xf]
        %v710 = vld [vmem:[#allocation4 + $0x20] sm:$0xf]
        %v711 = vld [vmem:[#allocation4 + $0x24] sm:$0xf]
        %v712 = vld [vmem:[#allocation4 + $0x28] sm:$0xf]
        %v713 = vld [vmem:[#allocation4 + $0x2c] sm:$0xf]
        %v714 = vld [vmem:[#allocation4 + $0x30] sm:$0xf]
        %v715 = vld [vmem:[#allocation4 + $0x34] sm:$0xf]
        %v716 = vld [vmem:[#allocation4 + $0x38] sm:$0xf]
        %v717 = vld [vmem:[#allocation4 + $0x3c] sm:$0xf]
        %v718 = vld [vmem:[%s6] sm:$0x1]
        %v720 = vlaneseq
        %v721 = vshrl.u32 %v720, 7
        %v722 = vsub.s32 0, %v721
        %v723 = vrot.slane %v718, %v722
        %v741 = vunpack.c.l.b16 %v702
        %v742 = vunpack.c.l.b16 %v703
        %v743 = vunpack.c.l.b16 %v704
        %v744 = vunpack.c.l.b16 %v705
        %v745 = vunpack.c.l.b16 %v706
        %v746 = vunpack.c.l.b16 %v707
        %v747 = vunpack.c.l.b16 %v708
        %v748 = vunpack.c.l.b16 %v709
        %v749 = vunpack.c.l.b16 %v710
        %v750 = vunpack.c.l.b16 %v711
        %v751 = vunpack.c.l.b16 %v712
        %v752 = vunpack.c.l.b16 %v713
        %v753 = vunpack.c.l.b16 %v714
        %v754 = vunpack.c.l.b16 %v715
        %v755 = vunpack.c.l.b16 %v716
        %v756 = vunpack.c.l.b16 %v717
        %v757 = vpack.c.b16 %v742, %v741
        %v758 = vpack.c.b16 %v744, %v743
        %v759 = vpack.c.b16 %v746, %v745
        %v760 = vpack.c.b16 %v748, %v747
        %v761 = vpack.c.b16 %v750, %v749
        %v762 = vpack.c.b16 %v752, %v751
        %v763 = vpack.c.b16 %v754, %v753
        %v764 = vpack.c.b16 %v756, %v755
        %773 = vmatprep.subr.bf16.mxu0 0
        %774 = vmatpush1.bf16.msra.mxu0 %v764
        %775 = vmatprep.subr.bf16.mxu0 0
        %776 = vmatpush1.bf16.msra.mxu0 %v763
        %777 = vmatprep.subr.bf16.mxu0 0
        %778 = vmatpush1.bf16.msra.mxu0 %v762
        %779 = vmatprep.subr.bf16.mxu0 0
        %780 = vmatpush1.bf16.msra.mxu0 %v761
        %781 = vmatprep.subr.bf16.mxu0 0
        %782 = vmatpush1.bf16.msra.mxu0 %v760
        %783 = vmatprep.subr.bf16.mxu0 0
        %784 = vmatpush1.bf16.msra.mxu0 %v759
        %785 = vmatprep.subr.bf16.mxu0 0
        %786 = vmatpush1.bf16.msra.mxu0 %v758
        %787 = vmatprep.subr.bf16.mxu0 0
        %788 = vmatpush1.bf16.msra.mxu0 %v757
        %789 = vmatprep.subr.bf16.mxu0 0
        %790 = vmatpush2.bf16.msra.mxu0 0
        %791 = vmatprep.subr.bf16.mxu0 0
        %792 = vmatpush2.bf16.msra.mxu0 0
        %793 = vmatprep.subr.bf16.mxu0 0
        %794 = vmatpush2.bf16.msra.mxu0 0
        %795 = vmatprep.subr.bf16.mxu0 0
        %796 = vmatpush2.bf16.msra.mxu0 0
        %797 = vmatprep.subr.bf16.mxu0 0
        %798 = vmatpush2.bf16.msra.mxu0 0
        %799 = vmatprep.subr.bf16.mxu0 0
        %800 = vmatpush2.bf16.msra.mxu0 0
        %801 = vmatprep.subr.bf16.mxu0 0
        %802 = vmatpush2.bf16.msra.mxu0 0
        %803 = vmatprep.subr.bf16.mxu0 0
        %804 = vmatpush2.bf16.msra.mxu0 0
        %805 = vmatprep.mubr.bf16.mxu0 0
        %806 = vmatmul.mubr.bf16.gmra.mxu0 %v697
        %v807 = vpop.f32.mrf.mxu0
        %v808 = vadd.f32 %v723, %v807
        %v809 = vpop.f32.mrf.mxu0
        %v810 = vpop.f32.mrf.mxu0
        %v811 = vadd.f32 %v723, %v810
        %v812 = vpop.f32.mrf.mxu0
        %813 = vmatprep.mubr.bf16.mxu0 0
        %814 = vmatmul.mubr.bf16.gmra.mxu0 %v698
        %v815 = vpop.f32.mrf.mxu0
        %v816 = vadd.f32 %v723, %v815
        %v817 = vpop.f32.mrf.mxu0
        %v818 = vpop.f32.mrf.mxu0
        %v819 = vadd.f32 %v723, %v818
        %v820 = vpop.f32.mrf.mxu0
        %821 = vmatprep.mubr.bf16.mxu0 0
        %822 = vmatmul.mubr.bf16.gmra.mxu0 %v699
        %v823 = vpop.f32.mrf.mxu0
        %v824 = vadd.f32 %v723, %v823
        %v825 = vpop.f32.mrf.mxu0
        %v826 = vpop.f32.mrf.mxu0
        %v827 = vadd.f32 %v723, %v826
        %v828 = vpop.f32.mrf.mxu0
        %829 = vmatprep.mubr.bf16.mxu0 0
        %830 = vmatmul.mubr.bf16.gmra.mxu0 %v700
        %v831 = vpop.f32.mrf.mxu0
        %v832 = vadd.f32 %v723, %v831
        %v833 = vpop.f32.mrf.mxu0
        %v834 = vpop.f32.mrf.mxu0
        %v835 = vadd.f32 %v723, %v834
        %v836 = vpop.f32.mrf.mxu0
        %837 = vmatprep.mubr.bf16.mxu0 0
        %838 = vmatmul.mubr.bf16.gmra.mxu0 %v701
        %v839 = vpop.f32.mrf.mxu0
        %v840 = vadd.f32 %v723, %v839
        %v841 = vpop.f32.mrf.mxu0
        %v842 = vpop.f32.mrf.mxu0
        %v843 = vadd.f32 %v723, %v842
        %v844 = vpop.f32.mrf.mxu0
        %845 = vdwg.mxu0
        %v846 = vmax.f32 %v808, 0.0
        %v847 = vmax.f32 %v811, 0.0
        %v848 = vmax.f32 %v816, 0.0
        %v849 = vmax.f32 %v819, 0.0
        %v850 = vmax.f32 %v824, 0.0
        %v851 = vmax.f32 %v827, 0.0
        %v852 = vmax.f32 %v832, 0.0
        %v853 = vmax.f32 %v835, 0.0
        %v854 = vmax.f32 %v840, 0.0
        %v855 = vmax.f32 %v843, 0.0
        %v856 = vpack.c.bf16 %v847, %v846
        %v857 = vpack.c.bf16 %v849, %v848
        %v858 = vpack.c.bf16 %v851, %v850
        %v859 = vpack.c.bf16 %v853, %v852
        %v860 = vpack.c.bf16 %v855, %v854
        %v861 = vld [vmem:[%s7] sm:$0xf]
        %v862 = vld [vmem:[%s7 + $0x4] sm:$0xf]
        %v863 = vld [vmem:[%s7 + $0x8] sm:$0xf]
        %v864 = vld [vmem:[%s7 + $0xc] sm:$0xf]
        %v865 = vld [vmem:[%s7 + $0x10] sm:$0xf]
        %v866 = vld [vmem:[%s7 + $0x14] sm:$0xf]
        %v867 = vld [vmem:[%s7 + $0x18] sm:$0xf]
        %v868 = vld [vmem:[%s7 + $0x1c] sm:$0xf]
        %v869 = vld [vmem:[%s7 + $0x20] sm:$0xf]
        %v870 = vld [vmem:[%s7 + $0x24] sm:$0xf]
        %v871 = vld [vmem:[%s7 + $0x28] sm:$0xf]
        %v872 = vld [vmem:[%s7 + $0x2c] sm:$0xf]
        %v873 = vld [vmem:[%s7 + $0x30] sm:$0xf]
        %v874 = vld [vmem:[%s7 + $0x34] sm:$0xf]
        %v875 = vld [vmem:[%s7 + $0x38] sm:$0xf]
        %v876 = vld [vmem:[%s7 + $0x3c] sm:$0xf]
        %v877 = vld [vmem:[%s8] sm:$0x1]
        %v879 = vlaneseq
        %v880 = vshrl.u32 %v879, 7
        %v881 = vsub.s32 0, %v880
        %v882 = vrot.slane %v877, %v881
        %v900 = vunpack.c.l.b16 %v861
        %v901 = vunpack.c.l.b16 %v862
        %v902 = vunpack.c.l.b16 %v863
        %v903 = vunpack.c.l.b16 %v864
        %v904 = vunpack.c.l.b16 %v865
        %v905 = vunpack.c.l.b16 %v866
        %v906 = vunpack.c.l.b16 %v867
        %v907 = vunpack.c.l.b16 %v868
        %v908 = vunpack.c.l.b16 %v869
        %v909 = vunpack.c.l.b16 %v870
        %v910 = vunpack.c.l.b16 %v871
        %v911 = vunpack.c.l.b16 %v872
        %v912 = vunpack.c.l.b16 %v873
        %v913 = vunpack.c.l.b16 %v874
        %v914 = vunpack.c.l.b16 %v875
        %v915 = vunpack.c.l.b16 %v876
        %v916 = vpack.c.b16 %v901, %v900
        %v917 = vpack.c.b16 %v903, %v902
        %v918 = vpack.c.b16 %v905, %v904
        %v919 = vpack.c.b16 %v907, %v906
        %v920 = vpack.c.b16 %v909, %v908
        %v921 = vpack.c.b16 %v911, %v910
        %v922 = vpack.c.b16 %v913, %v912
        %v923 = vpack.c.b16 %v915, %v914
        %932 = vmatprep.subr.bf16.mxu0 0
        %933 = vmatpush1.bf16.msra.mxu0 %v923
        %934 = vmatprep.subr.bf16.mxu0 0
        %935 = vmatpush1.bf16.msra.mxu0 %v922
        %936 = vmatprep.subr.bf16.mxu0 0
        %937 = vmatpush1.bf16.msra.mxu0 %v921
        %938 = vmatprep.subr.bf16.mxu0 0
        %939 = vmatpush1.bf16.msra.mxu0 %v920
        %940 = vmatprep.subr.bf16.mxu0 0
        %941 = vmatpush1.bf16.msra.mxu0 %v919
        %942 = vmatprep.subr.bf16.mxu0 0
        %943 = vmatpush1.bf16.msra.mxu0 %v918
        %944 = vmatprep.subr.bf16.mxu0 0
        %945 = vmatpush1.bf16.msra.mxu0 %v917
        %946 = vmatprep.subr.bf16.mxu0 0
        %947 = vmatpush1.bf16.msra.mxu0 %v916
        %948 = vmatprep.subr.bf16.mxu0 0
        %949 = vmatpush2.bf16.msra.mxu0 0
        %950 = vmatprep.subr.bf16.mxu0 0
        %951 = vmatpush2.bf16.msra.mxu0 0
        %952 = vmatprep.subr.bf16.mxu0 0
        %953 = vmatpush2.bf16.msra.mxu0 0
        %954 = vmatprep.subr.bf16.mxu0 0
        %955 = vmatpush2.bf16.msra.mxu0 0
        %956 = vmatprep.subr.bf16.mxu0 0
        %957 = vmatpush2.bf16.msra.mxu0 0
        %958 = vmatprep.subr.bf16.mxu0 0
        %959 = vmatpush2.bf16.msra.mxu0 0
        %960 = vmatprep.subr.bf16.mxu0 0
        %961 = vmatpush2.bf16.msra.mxu0 0
        %962 = vmatprep.subr.bf16.mxu0 0
        %963 = vmatpush2.bf16.msra.mxu0 0
        %964 = vmatprep.mubr.bf16.mxu0 0
        %965 = vmatmul.mubr.bf16.gmra.mxu0 %v856
        %v966 = vpop.f32.mrf.mxu0
        %v967 = vadd.f32 %v882, %v966
        %v968 = vpop.f32.mrf.mxu0
        %v969 = vpop.f32.mrf.mxu0
        %v970 = vadd.f32 %v882, %v969
        %v971 = vpop.f32.mrf.mxu0
        %972 = vmatprep.mubr.bf16.mxu0 0
        %973 = vmatmul.mubr.bf16.gmra.mxu0 %v857
        %v974 = vpop.f32.mrf.mxu0
        %v975 = vadd.f32 %v882, %v974
        %v976 = vpop.f32.mrf.mxu0
        %v977 = vpop.f32.mrf.mxu0
        %v978 = vadd.f32 %v882, %v977
        %v979 = vpop.f32.mrf.mxu0
        %980 = vmatprep.mubr.bf16.mxu0 0
        %981 = vmatmul.mubr.bf16.gmra.mxu0 %v858
        %v982 = vpop.f32.mrf.mxu0
        %v983 = vadd.f32 %v882, %v982
        %v984 = vpop.f32.mrf.mxu0
        %v985 = vpop.f32.mrf.mxu0
        %v986 = vadd.f32 %v882, %v985
        %v987 = vpop.f32.mrf.mxu0
        %988 = vmatprep.mubr.bf16.mxu0 0
        %989 = vmatmul.mubr.bf16.gmra.mxu0 %v859
        %v990 = vpop.f32.mrf.mxu0
        %v991 = vadd.f32 %v882, %v990
        %v992 = vpop.f32.mrf.mxu0
        %v993 = vpop.f32.mrf.mxu0
        %v994 = vadd.f32 %v882, %v993
        %v995 = vpop.f32.mrf.mxu0
        %996 = vmatprep.mubr.bf16.mxu0 0
        %997 = vmatmul.mubr.bf16.gmra.mxu0 %v860
        %v998 = vpop.f32.mrf.mxu0
        %v999 = vadd.f32 %v882, %v998
        %v1000 = vpop.f32.mrf.mxu0
        %v1001 = vpop.f32.mrf.mxu0
        %v1002 = vadd.f32 %v882, %v1001
        %v1003 = vpop.f32.mrf.mxu0
        %1004 = vdwg.mxu0
        %vm1005 = vcmask 64512
        %1006 = vst.msk [vmem:[%s368] sm:$0xff] %vm1005, %v967
        %1007 = vst.msk [vmem:[%s368 + $0x8] sm:$0xff] %vm1005, %v970
        %1008 = vst.msk [vmem:[%s368 + $0x10] sm:$0xff] %vm1005, %v975
        %1009 = vst.msk [vmem:[%s368 + $0x18] sm:$0xff] %vm1005, %v978
        %1010 = vst.msk [vmem:[%s368 + $0x20] sm:$0xff] %vm1005, %v983
        %1011 = vst.msk [vmem:[%s368 + $0x28] sm:$0xff] %vm1005, %v986
        %1012 = vst.msk [vmem:[%s368 + $0x30] sm:$0xff] %vm1005, %v991
        %1013 = vst.msk [vmem:[%s368 + $0x38] sm:$0xff] %vm1005, %v994
        %1014 = vst.msk [vmem:[%s368 + $0x40] sm:$0xff] %vm1005, %v999
        %1015 = vst.msk [vmem:[%s368 + $0x48] sm:$0xff] %vm1005, %v1002
        %s1016 = smul.u32 10, %s24
        %p1017 = scmp.lt.s32.totalorder %s1016, 19
        %s1018 = scalar_select %p1017, %s1016, 19
        %s1019 = smul.addr %s1018, 8
        %s1020 = scalar_lea.vmem %s9, %s1019
        // Predicated region
        $region65: #{tpu_custom_call.1} parent=55 // pred_check
          %p1021 = pneg %p236
        $region66: #{tpu_custom_call.1} parent=55 // pred_check_branch
          %1023 = sbr.rel (%p1021) target = $region68
        $region67: #{tpu_custom_call.1} parent=55 // pred_region
          %s1024 = smul.u32 10, %s24
        $region68: #{tpu_custom_call.1} parent=55 // pred_fallthru
          _
      $region56: #{tpu_custom_call.1} parent=5 // pred_fallthru
        _
      %p1025 = scmp.le.s32.totalorder 2, %s19
      // Predicated region
      $region69: #{tpu_custom_call.1} parent=5 // pred_check
        %p1026 = pneg %p1025
      $region70: #{tpu_custom_call.1} parent=5 // pred_check_branch
        %1028 = sbr.rel (%p1026) target = $region72
      $region71: #{tpu_custom_call.1} parent=5 // pred_region
        %s1029 = ssub.s32 %s19, 2
        // Predicated region
        $region73: #{tpu_custom_call.1} parent=71 // pred_check
          %p1030 = pneg %p242
        $region74: #{tpu_custom_call.1} parent=71 // pred_check_branch
          %1032 = sbr.rel (%p1030) target = $region76
        $region75: #{tpu_custom_call.1} parent=71 // pred_region
          %s1033 = smul.u32 10, %s25
          %p1034 = scmp.lt.s32.totalorder %s1033, 19
          %s1035 = scalar_select %p1034, %s1033, 19
          %s1036 = smul.addr %s1035, 8
          %s1037 = scalar_lea.vmem %s9, %s1036
        $region76: #{tpu_custom_call.1} parent=71 // pred_fallthru
          _
      $region72: #{tpu_custom_call.1} parent=5 // pred_fallthru
        _
    $region6: #{tpu_custom_call.1} parent=1 // loop_footer
      %s23 = sadd.s32 1, %s19
    $region7: #{tpu_custom_call.1} parent=1 // loop_footer_branch
      %18 = sbr.rel target = $region3
    $region8: #{tpu_custom_call.1} parent=1 // loop_exit
      _
    %1038 = vsyncpa [#allocation3], 1
    %s1039 = scalar_lea.sflag [#allocation3], 1
    %1040 = vsyncpa %s1039, 1
    %1041 = vsyncpa [#allocation5], 1

// kernel: tpu_custom_call.1
$region0: #{tpu_custom_call.1}
  #allocation0 [shape = 'u32[]', space=smem, size = 0x4, offset = 0x4, fixed_abs, tag = 'smem constant byte address 0x4 - core index']
  #allocation1 [shape = 'u32[144,128]{1,0:T(1,128)}', space=vmem, size = 0x12000, scoped, tag = 'internal scratch']
  %s0 = inlined_call_operand.hbm [shape: f32[154,128], index: 0, kind: input, shape index: {}]
  %s1 = inlined_call_operand.vmem [shape: f32[1,128], index: 1, kind: input, shape index: {}]
  %s2 = inlined_call_operand.vmem [shape: f32[1,128], index: 2, kind: input, shape index: {}]
  %s3 = inlined_call_operand.vmem [shape: bf16[128,128], index: 3, kind: input, shape index: {}]
  %s4 = inlined_call_operand.vmem [shape: f32[1,128], index: 4, kind: input, shape index: {}]
  %s5 = inlined_call_operand.hbm [shape: bf16[128,128], index: 5, kind: input, shape index: {}]
  %s6 = inlined_call_operand.vmem [shape: f32[1,128], index: 6, kind: input, shape index: {}]
  %s7 = inlined_call_operand.vmem [shape: bf16[128,8], index: 7, kind: input, shape index: {}]
  %s8 = inlined_call_operand.vmem [shape: f32[1,8], index: 8, kind: input, shape index: {}]
  %s9 = inlined_call_operand.vmem [shape: f32[154,8], index: 9, kind: output, shape index: {}]
  %s10 = sld [smem:[#allocation0]]
  $region77: #{tpu_custom_call.1} parent=0
    _
  %s12 = ssub.s32 1, %s10
  %s13 = scalar_select 0, %s12, %s10
  $region1: #{tpu_custom_call.1} parent=0
    #allocation2 [shape = 'u8[81920]{0}', space=vmem, size = 0x14000, scoped, tag = 'input window, operand 0']
    #allocation3 [shape = 's32[2]{0}', space=sflag, size = 0x8, scoped, tag = 'scoped memory for tpu_custom_call.1']
    #allocation4 [shape = 'u8[32768]{0}', space=vmem, size = 0x8000, scoped, tag = 'input window, operand 5, single buffered']
    #allocation5 [shape = 's32[1]{0}', space=sflag, size = 0x4, scoped, tag = 'scoped memory for tpu_custom_call.1']
    %14 = vsyncpa [#allocation3], 0
    %s15 = scalar_lea.sflag [#allocation3], 1
    %16 = vsyncpa %s15, 0
    %17 = vsyncpa [#allocation5], 0
    loop: start=0, step=1, limit=4
    $region2: #{tpu_custom_call.1} parent=1 // loop_pre_header
      _
    $region3: #{tpu_custom_call.1} parent=1 // loop_header
      %s19 = sphi 0, %s23
      %p20 = scmp.ge.s32.totalorder %s19, 4
      %s29 = sphi 0, %s31
      %s32 = sphi 0, %s29
      %s33 = sphi 0, %s32
      %s49 = sphi 0, %s33
      %s53 = sphi 0, %s53
      %s55 = sphi 0, %s53
      %s56 = sphi 0, %s55
      %s70 = sphi 0, %s56
      %s74 = sphi 0, %s74
      %s76 = sphi 0, %s74
      %s77 = sphi 0, %s76
      %s91 = sphi 0, %s77
      %s95 = sphi 0, %s95
      %s97 = sphi 0, %s95
      %s98 = sphi 0, %s97
      %s112 = sphi 0, %s98
      %s116 = sphi 0, %s116
      %s118 = sphi 0, %s116
      %s119 = sphi 0, %s118
      %s133 = sphi 0, %s119
      %s137 = sphi 0, %s137
      %s139 = sphi 0, %s137
      %s140 = sphi 0, %s139
      %s154 = sphi 0, %s140
      %s158 = sphi 0, %s158
      %s160 = sphi 0, %s158
      %s161 = sphi 0, %s160
      %s175 = sphi 0, %s161
      %s179 = sphi 0, %s179
      %s181 = sphi 0, %s179
      %s182 = sphi 0, %s181
      %s196 = sphi 0, %s182
      %s200 = sphi 0, %s200
      %s202 = sphi 0, %s200
      %s203 = sphi 0, %s202
      %s217 = sphi 0, %s203
      %s223 = sphi 0, %s225
      %s226 = sphi 0, %s223
      %s227 = sphi 0, %s226
      %s243 = sphi 0, %s227
    $region4: #{tpu_custom_call.1} parent=1 // loop_header_branch
      %22 = sbr.rel (%p20) target = $region8
    $region5: #{tpu_custom_call.1} parent=1 // loop_body
      %s24 = ssub.s32 %s19, 1
      %s25 = ssub.s32 %s19, 2
      %s26 = sadd.s32 %s19, 1
      %s27 = ssub.s32 %s19, %s26
      %p28 = scmp.eq.s32.totalorder %s27, 0
      %s30 = sadd.s32 %s29, 1
      %s31 = scalar_select %p28, %s29, %s30
      %p34 = pneg %p28
      %p35 = scmp.eq.s32.totalorder %s19, 1
      %p36 = por %p34, %p35
      %p37 = scmp.ne.s32.totalorder %s29, %s32
      %p38 = scmp.eq.s32.totalorder %s19, 0
      %p39 = por %p37, %p38
      %p40 = scmp.ne.s32.totalorder %s29, %s32
      %p41 = scmp.eq.s32.totalorder %s24, 1
      %p42 = por %p40, %p41
      %p43 = scmp.ne.s32.totalorder %s32, %s33
      %p44 = scmp.eq.s32.totalorder %s24, 0
      %p45 = por %p43, %p44
      %p46 = scmp.ne.s32.totalorder %s32, %s33
      %p47 = scmp.eq.s32.totalorder %s25, 1
      %p48 = por %p46, %p47
      %p50 = scmp.ne.s32.totalorder %s33, %s49
      %p51 = scmp.eq.s32.totalorder %s25, 0
      %p52 = por %p50, %p51
      %s54 = sadd.s32 %s53, 1
      %p57 = scmp.eq.s32.totalorder %s19, 1
      %p58 = scmp.ne.s32.totalorder %s53, %s55
      %p59 = scmp.eq.s32.totalorder %s19, 0
      %p60 = por %p58, %p59
      %p61 = scmp.ne.s32.totalorder %s53, %s55
      %p62 = scmp.eq.s32.totalorder %s24, 1
      %p63 = por %p61, %p62
      %p64 = scmp.ne.s32.totalorder %s55, %s56
      %p65 = scmp.eq.s32.totalorder %s24, 0
      %p66 = por %p64, %p65
      %p67 = scmp.ne.s32.totalorder %s55, %s56
      %p68 = scmp.eq.s32.totalorder %s25, 1
      %p69 = por %p67, %p68
      %p71 = scmp.ne.s32.totalorder %s56, %s70
      %p72 = scmp.eq.s32.totalorder %s25, 0
      %p73 = por %p71, %p72
      %s75 = sadd.s32 %s74, 1
      %p78 = scmp.eq.s32.totalorder %s19, 1
      %p79 = scmp.ne.s32.totalorder %s74, %s76
      %p80 = scmp.eq.s32.totalorder %s19, 0
      %p81 = por %p79, %p80
      %p82 = scmp.ne.s32.totalorder %s74, %s76
      %p83 = scmp.eq.s32.totalorder %s24, 1
      %p84 = por %p82, %p83
      %p85 = scmp.ne.s32.totalorder %s76, %s77
      %p86 = scmp.eq.s32.totalorder %s24, 0
      %p87 = por %p85, %p86
      %p88 = scmp.ne.s32.totalorder %s76, %s77
      %p89 = scmp.eq.s32.totalorder %s25, 1
      %p90 = por %p88, %p89
      %p92 = scmp.ne.s32.totalorder %s77, %s91
      %p93 = scmp.eq.s32.totalorder %s25, 0
      %p94 = por %p92, %p93
      %s96 = sadd.s32 %s95, 1
      %p99 = scmp.eq.s32.totalorder %s19, 1
      %p100 = scmp.ne.s32.totalorder %s95, %s97
      %p101 = scmp.eq.s32.totalorder %s19, 0
      %p102 = por %p100, %p101
      %p103 = scmp.ne.s32.totalorder %s95, %s97
      %p104 = scmp.eq.s32.totalorder %s24, 1
      %p105 = por %p103, %p104
      %p106 = scmp.ne.s32.totalorder %s97, %s98
      %p107 = scmp.eq.s32.totalorder %s24, 0
      %p108 = por %p106, %p107
      %p109 = scmp.ne.s32.totalorder %s97, %s98
      %p110 = scmp.eq.s32.totalorder %s25, 1
      %p111 = por %p109, %p110
      %p113 = scmp.ne.s32.totalorder %s98, %s112
      %p114 = scmp.eq.s32.totalorder %s25, 0
      %p115 = por %p113, %p114
      %s117 = sadd.s32 %s116, 1
      %p120 = scmp.eq.s32.totalorder %s19, 1
      %p121 = scmp.ne.s32.totalorder %s116, %s118
      %p122 = scmp.eq.s32.totalorder %s19, 0
      %p123 = por %p121, %p122
      %p124 = scmp.ne.s32.totalorder %s116, %s118
      %p125 = scmp.eq.s32.totalorder %s24, 1
      %p126 = por %p124, %p125
      %p127 = scmp.ne.s32.totalorder %s118, %s119
      %p128 = scmp.eq.s32.totalorder %s24, 0
      %p129 = por %p127, %p128
      %p130 = scmp.ne.s32.totalorder %s118, %s119
      %p131 = scmp.eq.s32.totalorder %s25, 1
      %p132 = por %p130, %p131
      %p134 = scmp.ne.s32.totalorder %s119, %s133
      %p135 = scmp.eq.s32.totalorder %s25, 0
      %p136 = por %p134, %p135
      %s138 = sadd.s32 %s137, 1
      %p141 = scmp.eq.s32.totalorder %s19, 1
      %p142 = scmp.ne.s32.totalorder %s137, %s139
      %p143 = scmp.eq.s32.totalorder %s19, 0
      %p144 = por %p142, %p143
      %p145 = scmp.ne.s32.totalorder %s137, %s139
      %p146 = scmp.eq.s32.totalorder %s24, 1
      %p147 = por %p145, %p146
      %p148 = scmp.ne.s32.totalorder %s139, %s140
      %p149 = scmp.eq.s32.totalorder %s24, 0
      %p150 = por %p148, %p149
      %p151 = scmp.ne.s32.totalorder %s139, %s140
      %p152 = scmp.eq.s32.totalorder %s25, 1
      %p153 = por %p151, %p152
      %p155 = scmp.ne.s32.totalorder %s140, %s154
      %p156 = scmp.eq.s32.totalorder %s25, 0
      %p157 = por %p155, %p156
      %s159 = sadd.s32 %s158, 1
      %p162 = scmp.eq.s32.totalorder %s19, 1
      %p163 = scmp.ne.s32.totalorder %s158, %s160
      %p164 = scmp.eq.s32.totalorder %s19, 0
      %p165 = por %p163, %p164
      %p166 = scmp.ne.s32.totalorder %s158, %s160
      %p167 = scmp.eq.s32.totalorder %s24, 1
      %p168 = por %p166, %p167
      %p169 = scmp.ne.s32.totalorder %s160, %s161
      %p170 = scmp.eq.s32.totalorder %s24, 0
      %p171 = por %p169, %p170
      %p172 = scmp.ne.s32.totalorder %s160, %s161
      %p173 = scmp.eq.s32.totalorder %s25, 1
      %p174 = por %p172, %p173
      %p176 = scmp.ne.s32.totalorder %s161, %s175
      %p177 = scmp.eq.s32.totalorder %s25, 0
      %p178 = por %p176, %p177
      %s180 = sadd.s32 %s179, 1
      %p183 = scmp.eq.s32.totalorder %s19, 1
      %p184 = scmp.ne.s32.totalorder %s179, %s181
      %p185 = scmp.eq.s32.totalorder %s19, 0
      %p186 = por %p184, %p185
      %p187 = scmp.ne.s32.totalorder %s179, %s181
      %p188 = scmp.eq.s32.totalorder %s24, 1
      %p189 = por %p187, %p188
      %p190 = scmp.ne.s32.totalorder %s181, %s182
      %p191 = scmp.eq.s32.totalorder %s24, 0
      %p192 = por %p190, %p191
      %p193 = scmp.ne.s32.totalorder %s181, %s182
      %p194 = scmp.eq.s32.totalorder %s25, 1
      %p195 = por %p193, %p194
      %p197 = scmp.ne.s32.totalorder %s182, %s196
      %p198 = scmp.eq.s32.totalorder %s25, 0
      %p199 = por %p197, %p198
      %s201 = sadd.s32 %s200, 1
      %p204 = scmp.eq.s32.totalorder %s19, 1
      %p205 = scmp.ne.s32.totalorder %s200, %s202
      %p206 = scmp.eq.s32.totalorder %s19, 0
      %p207 = por %p205, %p206
      %p208 = scmp.ne.s32.totalorder %s200, %s202
      %p209 = scmp.eq.s32.totalorder %s24, 1
      %p210 = por %p208, %p209
      %p211 = scmp.ne.s32.totalorder %s202, %s203
      %p212 = scmp.eq.s32.totalorder %s24, 0
      %p213 = por %p211, %p212
      %p214 = scmp.ne.s32.totalorder %s202, %s203
      %p215 = scmp.eq.s32.totalorder %s25, 1
      %p216 = por %p214, %p215
      %p218 = scmp.ne.s32.totalorder %s203, %s217
      %p219 = scmp.eq.s32.totalorder %s25, 0
      %p220 = por %p218, %p219
      %s221 = ssub.s32 %s19, %s26
      %p222 = scmp.eq.s32.totalorder %s221, 0
      %s224 = sadd.s32 %s223, 1
      %s225 = scalar_select %p222, %s223, %s224
      %p228 = pneg %p222
      %p229 = scmp.eq.s32.totalorder %s19, 1
      %p230 = por %p228, %p229
      %p231 = scmp.ne.s32.totalorder %s223, %s226
      %p232 = scmp.eq.s32.totalorder %s19, 0
      %p233 = por %p231, %p232
      %p234 = scmp.ne.s32.totalorder %s223, %s226
      %p235 = scmp.eq.s32.totalorder %s24, 1
      %p236 = por %p234, %p235
      %p237 = scmp.ne.s32.totalorder %s226, %s227
      %p238 = scmp.eq.s32.totalorder %s24, 0
      %p239 = por %p237, %p238
      %p240 = scmp.ne.s32.totalorder %s226, %s227
      %p241 = scmp.eq.s32.totalorder %s25, 1
      %p242 = por %p240, %p241
      %p244 = scmp.ne.s32.totalorder %s227, %s243
      %p245 = scmp.eq.s32.totalorder %s25, 0
      %p246 = por %p244, %p245
      %p247 = scmp.le.s32.totalorder 1, %s19
      %p248 = scmp.lt.s32.totalorder %s19, 3
      %p249 = pnand %p247, %p248
      %p250 = pneg %p249
      // Predicated region
      $region9: #{tpu_custom_call.1} parent=5 // pred_check
        _
      $region10: #{tpu_custom_call.1} parent=5 // pred_check_branch
        %252 = sbr.rel (%p249) target = $region12
      $region11: #{tpu_custom_call.1} parent=5 // pred_region
        %s253 = ssub.s32 %s19, 1
        // Predicated region
        $region13: #{tpu_custom_call.1} parent=11 // pred_check
          %p254 = pneg %p66
        $region14: #{tpu_custom_call.1} parent=11 // pred_check_branch
          %256 = sbr.rel (%p254) target = $region16
        $region15: #{tpu_custom_call.1} parent=11 // pred_region
          _
        $region16: #{tpu_custom_call.1} parent=11 // pred_fallthru
          _
        // Predicated region
        $region17: #{tpu_custom_call.1} parent=11 // pred_check
          %p257 = pneg %p87
        $region18: #{tpu_custom_call.1} parent=11 // pred_check_branch
          %259 = sbr.rel (%p257) target = $region20
        $region19: #{tpu_custom_call.1} parent=11 // pred_region
          _
        $region20: #{tpu_custom_call.1} parent=11 // pred_fallthru
          _
        // Predicated region
        $region21: #{tpu_custom_call.1} parent=11 // pred_check
          %p260 = pneg %p108
        $region22: #{tpu_custom_call.1} parent=11 // pred_check_branch
          %262 = sbr.rel (%p260) target = $region24
        $region23: #{tpu_custom_call.1} parent=11 // pred_region
          _
        $region24: #{tpu_custom_call.1} parent=11 // pred_fallthru
          _
        // Predicated region
        $region25: #{tpu_custom_call.1} parent=11 // pred_check
          %p263 = pneg %p129
        $region26: #{tpu_custom_call.1} parent=11 // pred_check_branch
          %265 = sbr.rel (%p263) target = $region28
        $region27: #{tpu_custom_call.1} parent=11 // pred_region
          _
        $region28: #{tpu_custom_call.1} parent=11 // pred_fallthru
          _
        // Predicated region
        $region29: #{tpu_custom_call.1} parent=11 // pred_check
          %p266 = pneg %p150
        $region30: #{tpu_custom_call.1} parent=11 // pred_check_branch
          %268 = sbr.rel (%p266) target = $region32
        $region31: #{tpu_custom_call.1} parent=11 // pred_region
          %s270 = ssub.s32 1024, 1024
          %271 = vsyncadd [#allocation5], %s270
          %s272 = sshll.u32 [#allocation4], 4
          %s273 = int_to_ptr.vmem [resolvable:$true] %s272
          %278 = dma.hbm_to_vmem [thread:$0]  %s5, 1024, %s273, [#allocation5], 64, 64, 4
        $region32: #{tpu_custom_call.1} parent=11 // pred_fallthru
          _
        // Predicated region
        $region33: #{tpu_custom_call.1} parent=11 // pred_check
          %p279 = pneg %p171
        $region34: #{tpu_custom_call.1} parent=11 // pred_check_branch
          %281 = sbr.rel (%p279) target = $region36
        $region35: #{tpu_custom_call.1} parent=11 // pred_region
          _
        $region36: #{tpu_custom_call.1} parent=11 // pred_fallthru
          _
        // Predicated region
        $region37: #{tpu_custom_call.1} parent=11 // pred_check
          %p282 = pneg %p192
        $region38: #{tpu_custom_call.1} parent=11 // pred_check_branch
          %284 = sbr.rel (%p282) target = $region40
        $region39: #{tpu_custom_call.1} parent=11 // pred_region
          _
        $region40: #{tpu_custom_call.1} parent=11 // pred_fallthru
          _
        // Predicated region
        $region41: #{tpu_custom_call.1} parent=11 // pred_check
          %p285 = pneg %p213
        $region42: #{tpu_custom_call.1} parent=11 // pred_check_branch
          %287 = sbr.rel (%p285) target = $region44
        $region43: #{tpu_custom_call.1} parent=11 // pred_region
          _
        $region44: #{tpu_custom_call.1} parent=11 // pred_fallthru
          _
      $region12: #{tpu_custom_call.1} parent=5 // pred_fallthru
        _
      %p288 = scmp.lt.s32.totalorder %s19, 2
      // Predicated region
      $region45: #{tpu_custom_call.1} parent=5 // pred_check
        %p289 = pneg %p288
      $region46: #{tpu_custom_call.1} parent=5 // pred_check_branch
        %291 = sbr.rel (%p289) target = $region48
      $region47: #{tpu_custom_call.1} parent=5 // pred_region
        // Predicated region
        $region49: #{tpu_custom_call.1} parent=47 // pred_check
          %p292 = pneg %p39
        $region50: #{tpu_custom_call.1} parent=47 // pred_check_branch
          %294 = sbr.rel (%p292) target = $region52
        $region51: #{tpu_custom_call.1} parent=47 // pred_region
          %s295 = sand.u32 %s29, 1
          %s296 = scalar_lea.sflag [#allocation3], %s295
          %s297 = sand.u32 %s29, 1
          %s298 = smul.addr %s297, 80
          %s299 = scalar_lea.vmem [#allocation2], %s298
          %s300 = smul.u32 10, %s19
          %s302 = ssub.s32 1280, 1280
          %303 = vsyncadd %s296, %s302
          %s304 = smul.addr %s300, 128
          %s305 = scalar_lea.hbm %s0, %s304
          %s306 = sshll.u32 %s299, 4
          %s307 = int_to_ptr.vmem [resolvable:$true] %s306
          %312 = dma.hbm_to_vmem [thread:$0]  %s305, 1280, %s307, %s296, 128, 128, 8
        $region52: #{tpu_custom_call.1} parent=47 // pred_fallthru
          _
      $region48: #{tpu_custom_call.1} parent=5 // pred_fallthru
        _
      %p313 = scmp.le.s32.totalorder 1, %s19
      %p314 = scmp.lt.s32.totalorder %s19, 3
      %p315 = pnand %p313, %p314
      %p316 = pneg %p315
      // Predicated region
      $region53: #{tpu_custom_call.1} parent=5 // pred_check
        _
      $region54: #{tpu_custom_call.1} parent=5 // pred_check_branch
        %318 = sbr.rel (%p315) target = $region56
      $region55: #{tpu_custom_call.1} parent=5 // pred_region
        %s319 = ssub.s32 %s19, 1
        %s320 = sand.u32 %s32, 1
        %s321 = scalar_lea.sflag [#allocation3], %s320
        %s322 = sand.u32 %s32, 1
        %s323 = smul.addr %s322, 80
        %s324 = scalar_lea.vmem [#allocation2], %s323
        // Predicated region
        $region57: #{tpu_custom_call.1} parent=55 // pred_check
          %p325 = pneg %p45
        $region58: #{tpu_custom_call.1} parent=55 // pred_check_branch
          %327 = sbr.rel (%p325) target = $region60
        $region59: #{tpu_custom_call.1} parent=55 // pred_region
          %328 = dma.done %s321, 1280
        $region60: #{tpu_custom_call.1} parent=55 // pred_fallthru
          _
        // Predicated region
        $region61: #{tpu_custom_call.1} parent=55 // pred_check
          %p329 = pneg %p150
        $region62: #{tpu_custom_call.1} parent=55 // pred_check_branch
          %331 = sbr.rel (%p329) target = $region64
        $region63: #{tpu_custom_call.1} parent=55 // pred_region
          %332 = dma.done [#allocation5], 1024
        $region64: #{tpu_custom_call.1} parent=55 // pred_fallthru
          _
        %s333 = sand.u32 %s32, 1
        %s334 = scalar_lea.sflag [#allocation3], %s333
        %s335 = sand.u32 %s32, 1
        %s336 = smul.addr %s335, 80
        %s337 = scalar_lea.vmem [#allocation2], %s336
        %p338 = pneg %p45
        %p339 = pneg %p42
        %p340 = pneg %p66
        %p341 = pneg %p63
        %p342 = pneg %p87
        %p343 = pneg %p84
        %p344 = pneg %p108
        %p345 = pneg %p105
        %p346 = pneg %p129
        %p347 = pneg %p126
        %p348 = pneg %p150
        %p349 = pneg %p147
        %p350 = pneg %p171
        %p351 = pneg %p168
        %p352 = pneg %p192
        %p353 = pneg %p189
        %p354 = pneg %p213
        %p355 = pneg %p210
        %p356 = pneg %p239
        %p357 = pneg %p236
        %s358 = smul.u32 10, %s24
        %p359 = scmp.lt.s32.totalorder %s358, 19
        %s360 = scalar_select %p359, %s358, 19
        %s361 = smul.addr %s360, 8
        %s362 = scalar_lea.vmem %s9, %s361
        %s363 = smul.u32 10, %s24
        %s364 = smul.u32 10, %s24
        %p365 = scmp.lt.s32.totalorder %s364, 19
        %s366 = scalar_select %p365, %s364, 19
        %s367 = smul.addr %s366, 8
        %s368 = scalar_lea.vmem %s9, %s367
        %s369 = smul.u32 10, %s24
        %v371 = vld [vmem:[%s324] sm:$0xff]
        %v372 = vld [vmem:[%s324 + $0x8] sm:$0xff]
        %v373 = vld [vmem:[%s324 + $0x10] sm:$0xff]
        %v374 = vld [vmem:[%s324 + $0x18] sm:$0xff]
        %v375 = vld [vmem:[%s324 + $0x20] sm:$0xff]
        %v376 = vld [vmem:[%s324 + $0x28] sm:$0xff]
        %v377 = vld [vmem:[%s324 + $0x30] sm:$0xff]
        %v378 = vld [vmem:[%s324 + $0x38] sm:$0xff]
        %v379 = vld [vmem:[%s324 + $0x40] sm:$0xff]
        %v380 = vld [vmem:[%s324 + $0x48] sm:$0xff]
        %v381 = vlaneseq
        %v382 = vand.u32 %v381, 127
        %vm383 = vcmp.lt.s32.totalorder %v382, 16
        %384 = vadd.xlane.f32.xlu0 %v371
        %v385 = vpop.xlane.xlu0 %384
        %386 = vadd.xlane.f32.xlu0 %v372
        %v387 = vpop.xlane.xlu0 %386
        %388 = vadd.xlane.f32.xlu0 %v373
        %v389 = vpop.xlane.xlu0 %388
        %390 = vadd.xlane.f32.xlu0 %v374
        %v391 = vpop.xlane.xlu0 %390
        %392 = vadd.xlane.f32.xlu0 %v375
        %v393 = vpop.xlane.xlu0 %392
        %394 = vadd.xlane.f32.xlu0 %v376
        %v395 = vpop.xlane.xlu0 %394
        %396 = vadd.xlane.f32.xlu0 %v377
        %v397 = vpop.xlane.xlu0 %396
        %398 = vadd.xlane.f32.xlu0 %v378
        %v399 = vpop.xlane.xlu0 %398
        %400 = vadd.xlane.f32.xlu0 %v379
        %v401 = vpop.xlane.xlu0 %400
        %402 = vadd.xlane.f32.xlu0 %v380
        %v403 = vpop.xlane.xlu0 %402
        %v404 = vmul.f32 %v385, 0.0625
        %v405 = vmul.f32 %v387, 0.0625
        %v406 = vmul.f32 %v389, 0.0625
        %v407 = vmul.f32 %v391, 0.0625
        %v408 = vmul.f32 %v393, 0.0625
        %v409 = vmul.f32 %v395, 0.0625
        %v410 = vmul.f32 %v397, 0.0625
        %v411 = vmul.f32 %v399, 0.0625
        %v412 = vmul.f32 %v401, 0.0625
        %v413 = vmul.f32 %v403, 0.0625
        %v414 = vsub.f32 %v371, %v404
        %v415 = vsub.f32 %v372, %v405
        %v416 = vsub.f32 %v373, %v406
        %v417 = vsub.f32 %v374, %v407
        %v418 = vsub.f32 %v375, %v408
        %v419 = vsub.f32 %v376, %v409
        %v420 = vsub.f32 %v377, %v410
        %v421 = vsub.f32 %v378, %v411
        %v422 = vsub.f32 %v379, %v412
        %v423 = vsub.f32 %v380, %v413
        %v424 = vsel %vm383, %v414, 0.0
        %v425 = vsel %vm383, %v415, 0.0
        %v426 = vsel %vm383, %v416, 0.0
        %v427 = vsel %vm383, %v417, 0.0
        %v428 = vsel %vm383, %v418, 0.0
        %v429 = vsel %vm383, %v419, 0.0
        %v430 = vsel %vm383, %v420, 0.0
        %v431 = vsel %vm383, %v421, 0.0
        %v432 = vsel %vm383, %v422, 0.0
        %v433 = vsel %vm383, %v423, 0.0
        %v434 = vmul.f32 %v424, %v424
        %v435 = vmul.f32 %v425, %v425
        %v436 = vmul.f32 %v426, %v426
        %v437 = vmul.f32 %v427, %v427
        %v438 = vmul.f32 %v428, %v428
        %v439 = vmul.f32 %v429, %v429
        %v440 = vmul.f32 %v430, %v430
        %v441 = vmul.f32 %v431, %v431
        %v442 = vmul.f32 %v432, %v432
        %v443 = vmul.f32 %v433, %v433
        %444 = vadd.xlane.f32.xlu0 %v434
        %v445 = vpop.xlane.xlu0 %444
        %446 = vadd.xlane.f32.xlu0 %v435
        %v447 = vpop.xlane.xlu0 %446
        %448 = vadd.xlane.f32.xlu0 %v436
        %v449 = vpop.xlane.xlu0 %448
        %450 = vadd.xlane.f32.xlu0 %v437
        %v451 = vpop.xlane.xlu0 %450
        %452 = vadd.xlane.f32.xlu0 %v438
        %v453 = vpop.xlane.xlu0 %452
        %454 = vadd.xlane.f32.xlu0 %v439
        %v455 = vpop.xlane.xlu0 %454
        %456 = vadd.xlane.f32.xlu0 %v440
        %v457 = vpop.xlane.xlu0 %456
        %458 = vadd.xlane.f32.xlu0 %v441
        %v459 = vpop.xlane.xlu0 %458
        %460 = vadd.xlane.f32.xlu0 %v442
        %v461 = vpop.xlane.xlu0 %460
        %462 = vadd.xlane.f32.xlu0 %v443
        %v463 = vpop.xlane.xlu0 %462
        %v464 = vmul.f32 %v445, 0.0625
        %v465 = vmul.f32 %v447, 0.0625
        %v466 = vmul.f32 %v449, 0.0625
        %v467 = vmul.f32 %v451, 0.0625
        %v468 = vmul.f32 %v453, 0.0625
        %v469 = vmul.f32 %v455, 0.0625
        %v470 = vmul.f32 %v457, 0.0625
        %v471 = vmul.f32 %v459, 0.0625
        %v472 = vmul.f32 %v461, 0.0625
        %v473 = vmul.f32 %v463, 0.0625
        %v474 = vadd.f32 %v464, 1e-05
        %v475 = vadd.f32 %v465, 1e-05
        %v476 = vadd.f32 %v466, 1e-05
        %v477 = vadd.f32 %v467, 1e-05
        %v478 = vadd.f32 %v468, 1e-05
        %v479 = vadd.f32 %v469, 1e-05
        %v480 = vadd.f32 %v470, 1e-05
        %v481 = vadd.f32 %v471, 1e-05
        %v482 = vadd.f32 %v472, 1e-05
        %v483 = vadd.f32 %v473, 1e-05
        %v484 = vrsqrt.pop %v474
        %v485 = vrsqrt.pop %v475
        %v486 = vrsqrt.pop %v476
        %v487 = vrsqrt.pop %v477
        %v488 = vrsqrt.pop %v478
        %v489 = vrsqrt.pop %v479
        %v490 = vrsqrt.pop %v480
        %v491 = vrsqrt.pop %v481
        %v492 = vrsqrt.pop %v482
        %v493 = vrsqrt.pop %v483
        %v494 = vmul.f32 %v424, %v484
        %v495 = vmul.f32 %v425, %v485
        %v496 = vmul.f32 %v426, %v486
        %v497 = vmul.f32 %v427, %v487
        %v498 = vmul.f32 %v428, %v488
        %v499 = vmul.f32 %v429, %v489
        %v500 = vmul.f32 %v430, %v490
        %v501 = vmul.f32 %v431, %v491
        %v502 = vmul.f32 %v432, %v492
        %v503 = vmul.f32 %v433, %v493
        %v504 = vld [vmem:[%s1] sm:$0x1]
        %v506 = vlaneseq
        %v507 = vshrl.u32 %v506, 7
        %v508 = vsub.s32 0, %v507
        %v509 = vrot.slane %v504, %v508
        %v511 = vmul.f32 %v494, %v509
        %v512 = vmul.f32 %v495, %v509
        %v513 = vmul.f32 %v496, %v509
        %v514 = vmul.f32 %v497, %v509
        %v515 = vmul.f32 %v498, %v509
        %v516 = vmul.f32 %v499, %v509
        %v517 = vmul.f32 %v500, %v509
        %v518 = vmul.f32 %v501, %v509
        %v519 = vmul.f32 %v502, %v509
        %v520 = vmul.f32 %v503, %v509
        %v521 = vld [vmem:[%s2] sm:$0x1]
        %v523 = vlaneseq
        %v524 = vshrl.u32 %v523, 7
        %v525 = vsub.s32 0, %v524
        %v526 = vrot.slane %v521, %v525
        %v528 = vadd.f32 %v511, %v526
        %v529 = vadd.f32 %v512, %v526
        %v530 = vadd.f32 %v513, %v526
        %v531 = vadd.f32 %v514, %v526
        %v532 = vadd.f32 %v515, %v526
        %v533 = vadd.f32 %v516, %v526
        %v534 = vadd.f32 %v517, %v526
        %v535 = vadd.f32 %v518, %v526
        %v536 = vadd.f32 %v519, %v526
        %v537 = vadd.f32 %v520, %v526
        %v538 = vpack.c.bf16 %v529, %v528
        %v539 = vpack.c.bf16 %v531, %v530
        %v540 = vpack.c.bf16 %v533, %v532
        %v541 = vpack.c.bf16 %v535, %v534
        %v542 = vpack.c.bf16 %v537, %v536
        %v543 = vld [vmem:[%s3] sm:$0xf]
        %v544 = vld [vmem:[%s3 + $0x4] sm:$0xf]
        %v545 = vld [vmem:[%s3 + $0x8] sm:$0xf]
        %v546 = vld [vmem:[%s3 + $0xc] sm:$0xf]
        %v547 = vld [vmem:[%s3 + $0x10] sm:$0xf]
        %v548 = vld [vmem:[%s3 + $0x14] sm:$0xf]
        %v549 = vld [vmem:[%s3 + $0x18] sm:$0xf]
        %v550 = vld [vmem:[%s3 + $0x1c] sm:$0xf]
        %v551 = vld [vmem:[%s3 + $0x20] sm:$0xf]
        %v552 = vld [vmem:[%s3 + $0x24] sm:$0xf]
        %v553 = vld [vmem:[%s3 + $0x28] sm:$0xf]
        %v554 = vld [vmem:[%s3 + $0x2c] sm:$0xf]
        %v555 = vld [vmem:[%s3 + $0x30] sm:$0xf]
        %v556 = vld [vmem:[%s3 + $0x34] sm:$0xf]
        %v557 = vld [vmem:[%s3 + $0x38] sm:$0xf]
        %v558 = vld [vmem:[%s3 + $0x3c] sm:$0xf]
        %v559 = vld [vmem:[%s4] sm:$0x1]
        %v561 = vlaneseq
        %v562 = vshrl.u32 %v561, 7
        %v563 = vsub.s32 0, %v562
        %v564 = vrot.slane %v559, %v563
        %v582 = vunpack.c.l.b16 %v543
        %v583 = vunpack.c.l.b16 %v544
        %v584 = vunpack.c.l.b16 %v545
        %v585 = vunpack.c.l.b16 %v546
        %v586 = vunpack.c.l.b16 %v547
        %v587 = vunpack.c.l.b16 %v548
        %v588 = vunpack.c.l.b16 %v549
        %v589 = vunpack.c.l.b16 %v550
        %v590 = vunpack.c.l.b16 %v551
        %v591 = vunpack.c.l.b16 %v552
        %v592 = vunpack.c.l.b16 %v553
        %v593 = vunpack.c.l.b16 %v554
        %v594 = vunpack.c.l.b16 %v555
        %v595 = vunpack.c.l.b16 %v556
        %v596 = vunpack.c.l.b16 %v557
        %v597 = vunpack.c.l.b16 %v558
        %v598 = vpack.c.b16 %v583, %v582
        %v599 = vpack.c.b16 %v585, %v584
        %v600 = vpack.c.b16 %v587, %v586
        %v601 = vpack.c.b16 %v589, %v588
        %v602 = vpack.c.b16 %v591, %v590
        %v603 = vpack.c.b16 %v593, %v592
        %v604 = vpack.c.b16 %v595, %v594
        %v605 = vpack.c.b16 %v597, %v596
        %614 = vmatprep.subr.bf16.mxu0 0
        %615 = vmatpush1.bf16.msra.mxu0 %v605
        %616 = vmatprep.subr.bf16.mxu0 0
        %617 = vmatpush1.bf16.msra.mxu0 %v604
        %618 = vmatprep.subr.bf16.mxu0 0
        %619 = vmatpush1.bf16.msra.mxu0 %v603
        %620 = vmatprep.subr.bf16.mxu0 0
        %621 = vmatpush1.bf16.msra.mxu0 %v602
        %622 = vmatprep.subr.bf16.mxu0 0
        %623 = vmatpush1.bf16.msra.mxu0 %v601
        %624 = vmatprep.subr.bf16.mxu0 0
        %625 = vmatpush1.bf16.msra.mxu0 %v600
        %626 = vmatprep.subr.bf16.mxu0 0
        %627 = vmatpush1.bf16.msra.mxu0 %v599
        %628 = vmatprep.subr.bf16.mxu0 0
        %629 = vmatpush1.bf16.msra.mxu0 %v598
        %630 = vmatprep.subr.bf16.mxu0 0
        %631 = vmatpush2.bf16.msra.mxu0 0
        %632 = vmatprep.subr.bf16.mxu0 0
        %633 = vmatpush2.bf16.msra.mxu0 0
        %634 = vmatprep.subr.bf16.mxu0 0
        %635 = vmatpush2.bf16.msra.mxu0 0
        %636 = vmatprep.subr.bf16.mxu0 0
        %637 = vmatpush2.bf16.msra.mxu0 0
        %638 = vmatprep.subr.bf16.mxu0 0
        %639 = vmatpush2.bf16.msra.mxu0 0
        %640 = vmatprep.subr.bf16.mxu0 0
        %641 = vmatpush2.bf16.msra.mxu0 0
        %642 = vmatprep.subr.bf16.mxu0 0
        %643 = vmatpush2.bf16.msra.mxu0 0
        %644 = vmatprep.subr.bf16.mxu0 0
        %645 = vmatpush2.bf16.msra.mxu0 0
        %646 = vmatprep.mubr.bf16.mxu0 0
        %647 = vmatmul.mubr.bf16.gmra.mxu0 %v538
        %v648 = vpop.f32.mrf.mxu0
        %v649 = vadd.f32 %v564, %v648
        %v650 = vpop.f32.mrf.mxu0
        %v651 = vpop.f32.mrf.mxu0
        %v652 = vadd.f32 %v564, %v651
        %v653 = vpop.f32.mrf.mxu0
        %654 = vmatprep.mubr.bf16.mxu0 0
        %655 = vmatmul.mubr.bf16.gmra.mxu0 %v539
        %v656 = vpop.f32.mrf.mxu0
        %v657 = vadd.f32 %v564, %v656
        %v658 = vpop.f32.mrf.mxu0
        %v659 = vpop.f32.mrf.mxu0
        %v660 = vadd.f32 %v564, %v659
        %v661 = vpop.f32.mrf.mxu0
        %662 = vmatprep.mubr.bf16.mxu0 0
        %663 = vmatmul.mubr.bf16.gmra.mxu0 %v540
        %v664 = vpop.f32.mrf.mxu0
        %v665 = vadd.f32 %v564, %v664
        %v666 = vpop.f32.mrf.mxu0
        %v667 = vpop.f32.mrf.mxu0
        %v668 = vadd.f32 %v564, %v667
        %v669 = vpop.f32.mrf.mxu0
        %670 = vmatprep.mubr.bf16.mxu0 0
        %671 = vmatmul.mubr.bf16.gmra.mxu0 %v541
        %v672 = vpop.f32.mrf.mxu0
        %v673 = vadd.f32 %v564, %v672
        %v674 = vpop.f32.mrf.mxu0
        %v675 = vpop.f32.mrf.mxu0
        %v676 = vadd.f32 %v564, %v675
        %v677 = vpop.f32.mrf.mxu0
        %678 = vmatprep.mubr.bf16.mxu0 0
        %679 = vmatmul.mubr.bf16.gmra.mxu0 %v542
        %v680 = vpop.f32.mrf.mxu0
        %v681 = vadd.f32 %v564, %v680
        %v682 = vpop.f32.mrf.mxu0
        %v683 = vpop.f32.mrf.mxu0
        %v684 = vadd.f32 %v564, %v683
        %v685 = vpop.f32.mrf.mxu0
        %686 = vdwg.mxu0
        %v687 = vmax.f32 %v649, 0.0
        %v688 = vmax.f32 %v652, 0.0
        %v689 = vmax.f32 %v657, 0.0
        %v690 = vmax.f32 %v660, 0.0
        %v691 = vmax.f32 %v665, 0.0
        %v692 = vmax.f32 %v668, 0.0
        %v693 = vmax.f32 %v673, 0.0
        %v694 = vmax.f32 %v676, 0.0
        %v695 = vmax.f32 %v681, 0.0
        %v696 = vmax.f32 %v684, 0.0
        %v697 = vpack.c.bf16 %v688, %v687
        %v698 = vpack.c.bf16 %v690, %v689
        %v699 = vpack.c.bf16 %v692, %v691
        %v700 = vpack.c.bf16 %v694, %v693
        %v701 = vpack.c.bf16 %v696, %v695
        %v702 = vld [vmem:[#allocation4] sm:$0xf]
        %v703 = vld [vmem:[#allocation4 + $0x4] sm:$0xf]
        %v704 = vld [vmem:[#allocation4 + $0x8] sm:$0xf]
        %v705 = vld [vmem:[#allocation4 + $0xc] sm:$0xf]
        %v706 = vld [vmem:[#allocation4 + $0x10] sm:$0xf]
        %v707 = vld [vmem:[#allocation4 + $0x14] sm:$0xf]
        %v708 = vld [vmem:[#allocation4 + $0x18] sm:$0xf]
        %v709 = vld [vmem:[#allocation4 + $0x1c] sm:$0xf]
        %v710 = vld [vmem:[#allocation4 + $0x20] sm:$0xf]
        %v711 = vld [vmem:[#allocation4 + $0x24] sm:$0xf]
        %v712 = vld [vmem:[#allocation4 + $0x28] sm:$0xf]
        %v713 = vld [vmem:[#allocation4 + $0x2c] sm:$0xf]
        %v714 = vld [vmem:[#allocation4 + $0x30] sm:$0xf]
        %v715 = vld [vmem:[#allocation4 + $0x34] sm:$0xf]
        %v716 = vld [vmem:[#allocation4 + $0x38] sm:$0xf]
        %v717 = vld [vmem:[#allocation4 + $0x3c] sm:$0xf]
        %v718 = vld [vmem:[%s6] sm:$0x1]
        %v720 = vlaneseq
        %v721 = vshrl.u32 %v720, 7
        %v722 = vsub.s32 0, %v721
        %v723 = vrot.slane %v718, %v722
        %v741 = vunpack.c.l.b16 %v702
        %v742 = vunpack.c.l.b16 %v703
        %v743 = vunpack.c.l.b16 %v704
        %v744 = vunpack.c.l.b16 %v705
        %v745 = vunpack.c.l.b16 %v706
        %v746 = vunpack.c.l.b16 %v707
        %v747 = vunpack.c.l.b16 %v708
        %v748 = vunpack.c.l.b16 %v709
        %v749 = vunpack.c.l.b16 %v710
        %v750 = vunpack.c.l.b16 %v711
        %v751 = vunpack.c.l.b16 %v712
        %v752 = vunpack.c.l.b16 %v713
        %v753 = vunpack.c.l.b16 %v714
        %v754 = vunpack.c.l.b16 %v715
        %v755 = vunpack.c.l.b16 %v716
        %v756 = vunpack.c.l.b16 %v717
        %v757 = vpack.c.b16 %v742, %v741
        %v758 = vpack.c.b16 %v744, %v743
        %v759 = vpack.c.b16 %v746, %v745
        %v760 = vpack.c.b16 %v748, %v747
        %v761 = vpack.c.b16 %v750, %v749
        %v762 = vpack.c.b16 %v752, %v751
        %v763 = vpack.c.b16 %v754, %v753
        %v764 = vpack.c.b16 %v756, %v755
        %773 = vmatprep.subr.bf16.mxu0 0
        %774 = vmatpush1.bf16.msra.mxu0 %v764
        %775 = vmatprep.subr.bf16.mxu0 0
        %776 = vmatpush1.bf16.msra.mxu0 %v763
        %777 = vmatprep.subr.bf16.mxu0 0
        %778 = vmatpush1.bf16.msra.mxu0 %v762
        %779 = vmatprep.subr.bf16.mxu0 0
        %780 = vmatpush1.bf16.msra.mxu0 %v761
        %781 = vmatprep.subr.bf16.mxu0 0
        %782 = vmatpush1.bf16.msra.mxu0 %v760
        %783 = vmatprep.subr.bf16.mxu0 0
        %784 = vmatpush1.bf16.msra.mxu0 %v759
        %785 = vmatprep.subr.bf16.mxu0 0
        %786 = vmatpush1.bf16.msra.mxu0 %v758
        %787 = vmatprep.subr.bf16.mxu0 0
        %788 = vmatpush1.bf16.msra.mxu0 %v757
        %789 = vmatprep.subr.bf16.mxu0 0
        %790 = vmatpush2.bf16.msra.mxu0 0
        %791 = vmatprep.subr.bf16.mxu0 0
        %792 = vmatpush2.bf16.msra.mxu0 0
        %793 = vmatprep.subr.bf16.mxu0 0
        %794 = vmatpush2.bf16.msra.mxu0 0
        %795 = vmatprep.subr.bf16.mxu0 0
        %796 = vmatpush2.bf16.msra.mxu0 0
        %797 = vmatprep.subr.bf16.mxu0 0
        %798 = vmatpush2.bf16.msra.mxu0 0
        %799 = vmatprep.subr.bf16.mxu0 0
        %800 = vmatpush2.bf16.msra.mxu0 0
        %801 = vmatprep.subr.bf16.mxu0 0
        %802 = vmatpush2.bf16.msra.mxu0 0
        %803 = vmatprep.subr.bf16.mxu0 0
        %804 = vmatpush2.bf16.msra.mxu0 0
        %805 = vmatprep.mubr.bf16.mxu0 0
        %806 = vmatmul.mubr.bf16.gmra.mxu0 %v697
        %v807 = vpop.f32.mrf.mxu0
        %v808 = vadd.f32 %v723, %v807
        %v809 = vpop.f32.mrf.mxu0
        %v810 = vpop.f32.mrf.mxu0
        %v811 = vadd.f32 %v723, %v810
        %v812 = vpop.f32.mrf.mxu0
        %813 = vmatprep.mubr.bf16.mxu0 0
        %814 = vmatmul.mubr.bf16.gmra.mxu0 %v698
        %v815 = vpop.f32.mrf.mxu0
        %v816 = vadd.f32 %v723, %v815
        %v817 = vpop.f32.mrf.mxu0
        %v818 = vpop.f32.mrf.mxu0
        %v819 = vadd.f32 %v723, %v818
        %v820 = vpop.f32.mrf.mxu0
        %821 = vmatprep.mubr.bf16.mxu0 0
        %822 = vmatmul.mubr.bf16.gmra.mxu0 %v699
        %v823 = vpop.f32.mrf.mxu0
        %v824 = vadd.f32 %v723, %v823
        %v825 = vpop.f32.mrf.mxu0
        %v826 = vpop.f32.mrf.mxu0
        %v827 = vadd.f32 %v723, %v826
        %v828 = vpop.f32.mrf.mxu0
        %829 = vmatprep.mubr.bf16.mxu0 0
        %830 = vmatmul.mubr.bf16.gmra.mxu0 %v700
        %v831 = vpop.f32.mrf.mxu0
        %v832 = vadd.f32 %v723, %v831
        %v833 = vpop.f32.mrf.mxu0
        %v834 = vpop.f32.mrf.mxu0
        %v835 = vadd.f32 %v723, %v834
        %v836 = vpop.f32.mrf.mxu0
        %837 = vmatprep.mubr.bf16.mxu0 0
        %838 = vmatmul.mubr.bf16.gmra.mxu0 %v701
        %v839 = vpop.f32.mrf.mxu0
        %v840 = vadd.f32 %v723, %v839
        %v841 = vpop.f32.mrf.mxu0
        %v842 = vpop.f32.mrf.mxu0
        %v843 = vadd.f32 %v723, %v842
        %v844 = vpop.f32.mrf.mxu0
        %845 = vdwg.mxu0
        %v846 = vmax.f32 %v808, 0.0
        %v847 = vmax.f32 %v811, 0.0
        %v848 = vmax.f32 %v816, 0.0
        %v849 = vmax.f32 %v819, 0.0
        %v850 = vmax.f32 %v824, 0.0
        %v851 = vmax.f32 %v827, 0.0
        %v852 = vmax.f32 %v832, 0.0
        %v853 = vmax.f32 %v835, 0.0
        %v854 = vmax.f32 %v840, 0.0
        %v855 = vmax.f32 %v843, 0.0
        %v856 = vpack.c.bf16 %v847, %v846
        %v857 = vpack.c.bf16 %v849, %v848
        %v858 = vpack.c.bf16 %v851, %v850
        %v859 = vpack.c.bf16 %v853, %v852
        %v860 = vpack.c.bf16 %v855, %v854
        %v861 = vld [vmem:[%s7] sm:$0xf]
        %v862 = vld [vmem:[%s7 + $0x4] sm:$0xf]
        %v863 = vld [vmem:[%s7 + $0x8] sm:$0xf]
        %v864 = vld [vmem:[%s7 + $0xc] sm:$0xf]
        %v865 = vld [vmem:[%s7 + $0x10] sm:$0xf]
        %v866 = vld [vmem:[%s7 + $0x14] sm:$0xf]
        %v867 = vld [vmem:[%s7 + $0x18] sm:$0xf]
        %v868 = vld [vmem:[%s7 + $0x1c] sm:$0xf]
        %v869 = vld [vmem:[%s7 + $0x20] sm:$0xf]
        %v870 = vld [vmem:[%s7 + $0x24] sm:$0xf]
        %v871 = vld [vmem:[%s7 + $0x28] sm:$0xf]
        %v872 = vld [vmem:[%s7 + $0x2c] sm:$0xf]
        %v873 = vld [vmem:[%s7 + $0x30] sm:$0xf]
        %v874 = vld [vmem:[%s7 + $0x34] sm:$0xf]
        %v875 = vld [vmem:[%s7 + $0x38] sm:$0xf]
        %v876 = vld [vmem:[%s7 + $0x3c] sm:$0xf]
        %v877 = vld [vmem:[%s8] sm:$0x1]
        %v879 = vlaneseq
        %v880 = vshrl.u32 %v879, 7
        %v881 = vsub.s32 0, %v880
        %v882 = vrot.slane %v877, %v881
        %v900 = vunpack.c.l.b16 %v861
        %v901 = vunpack.c.l.b16 %v862
        %v902 = vunpack.c.l.b16 %v863
        %v903 = vunpack.c.l.b16 %v864
        %v904 = vunpack.c.l.b16 %v865
        %v905 = vunpack.c.l.b16 %v866
        %v906 = vunpack.c.l.b16 %v867
        %v907 = vunpack.c.l.b16 %v868
        %v908 = vunpack.c.l.b16 %v869
        %v909 = vunpack.c.l.b16 %v870
        %v910 = vunpack.c.l.b16 %v871
        %v911 = vunpack.c.l.b16 %v872
        %v912 = vunpack.c.l.b16 %v873
        %v913 = vunpack.c.l.b16 %v874
        %v914 = vunpack.c.l.b16 %v875
        %v915 = vunpack.c.l.b16 %v876
        %v916 = vpack.c.b16 %v901, %v900
        %v917 = vpack.c.b16 %v903, %v902
        %v918 = vpack.c.b16 %v905, %v904
        %v919 = vpack.c.b16 %v907, %v906
        %v920 = vpack.c.b16 %v909, %v908
        %v921 = vpack.c.b16 %v911, %v910
        %v922 = vpack.c.b16 %v913, %v912
        %v923 = vpack.c.b16 %v915, %v914
        %932 = vmatprep.subr.bf16.mxu0 0
        %933 = vmatpush1.bf16.msra.mxu0 %v923
        %934 = vmatprep.subr.bf16.mxu0 0
        %935 = vmatpush1.bf16.msra.mxu0 %v922
        %936 = vmatprep.subr.bf16.mxu0 0
        %937 = vmatpush1.bf16.msra.mxu0 %v921
        %938 = vmatprep.subr.bf16.mxu0 0
        %939 = vmatpush1.bf16.msra.mxu0 %v920
        %940 = vmatprep.subr.bf16.mxu0 0
        %941 = vmatpush1.bf16.msra.mxu0 %v919
        %942 = vmatprep.subr.bf16.mxu0 0
        %943 = vmatpush1.bf16.msra.mxu0 %v918
        %944 = vmatprep.subr.bf16.mxu0 0
        %945 = vmatpush1.bf16.msra.mxu0 %v917
        %946 = vmatprep.subr.bf16.mxu0 0
        %947 = vmatpush1.bf16.msra.mxu0 %v916
        %948 = vmatprep.subr.bf16.mxu0 0
        %949 = vmatpush2.bf16.msra.mxu0 0
        %950 = vmatprep.subr.bf16.mxu0 0
        %951 = vmatpush2.bf16.msra.mxu0 0
        %952 = vmatprep.subr.bf16.mxu0 0
        %953 = vmatpush2.bf16.msra.mxu0 0
        %954 = vmatprep.subr.bf16.mxu0 0
        %955 = vmatpush2.bf16.msra.mxu0 0
        %956 = vmatprep.subr.bf16.mxu0 0
        %957 = vmatpush2.bf16.msra.mxu0 0
        %958 = vmatprep.subr.bf16.mxu0 0
        %959 = vmatpush2.bf16.msra.mxu0 0
        %960 = vmatprep.subr.bf16.mxu0 0
        %961 = vmatpush2.bf16.msra.mxu0 0
        %962 = vmatprep.subr.bf16.mxu0 0
        %963 = vmatpush2.bf16.msra.mxu0 0
        %964 = vmatprep.mubr.bf16.mxu0 0
        %965 = vmatmul.mubr.bf16.gmra.mxu0 %v856
        %v966 = vpop.f32.mrf.mxu0
        %v967 = vadd.f32 %v882, %v966
        %v968 = vpop.f32.mrf.mxu0
        %v969 = vpop.f32.mrf.mxu0
        %v970 = vadd.f32 %v882, %v969
        %v971 = vpop.f32.mrf.mxu0
        %972 = vmatprep.mubr.bf16.mxu0 0
        %973 = vmatmul.mubr.bf16.gmra.mxu0 %v857
        %v974 = vpop.f32.mrf.mxu0
        %v975 = vadd.f32 %v882, %v974
        %v976 = vpop.f32.mrf.mxu0
        %v977 = vpop.f32.mrf.mxu0
        %v978 = vadd.f32 %v882, %v977
        %v979 = vpop.f32.mrf.mxu0
        %980 = vmatprep.mubr.bf16.mxu0 0
        %981 = vmatmul.mubr.bf16.gmra.mxu0 %v858
        %v982 = vpop.f32.mrf.mxu0
        %v983 = vadd.f32 %v882, %v982
        %v984 = vpop.f32.mrf.mxu0
        %v985 = vpop.f32.mrf.mxu0
        %v986 = vadd.f32 %v882, %v985
        %v987 = vpop.f32.mrf.mxu0
        %988 = vmatprep.mubr.bf16.mxu0 0
        %989 = vmatmul.mubr.bf16.gmra.mxu0 %v859
        %v990 = vpop.f32.mrf.mxu0
        %v991 = vadd.f32 %v882, %v990
        %v992 = vpop.f32.mrf.mxu0
        %v993 = vpop.f32.mrf.mxu0
        %v994 = vadd.f32 %v882, %v993
        %v995 = vpop.f32.mrf.mxu0
        %996 = vmatprep.mubr.bf16.mxu0 0
        %997 = vmatmul.mubr.bf16.gmra.mxu0 %v860
        %v998 = vpop.f32.mrf.mxu0
        %v999 = vadd.f32 %v882, %v998
        %v1000 = vpop.f32.mrf.mxu0
        %v1001 = vpop.f32.mrf.mxu0
        %v1002 = vadd.f32 %v882, %v1001
        %v1003 = vpop.f32.mrf.mxu0
        %1004 = vdwg.mxu0
        %vm1005 = vcmask 64512
        %1006 = vst.msk [vmem:[%s368] sm:$0xff] %vm1005, %v967
        %1007 = vst.msk [vmem:[%s368 + $0x8] sm:$0xff] %vm1005, %v970
        %1008 = vst.msk [vmem:[%s368 + $0x10] sm:$0xff] %vm1005, %v975
        %1009 = vst.msk [vmem:[%s368 + $0x18] sm:$0xff] %vm1005, %v978
        %1010 = vst.msk [vmem:[%s368 + $0x20] sm:$0xff] %vm1005, %v983
        %1011 = vst.msk [vmem:[%s368 + $0x28] sm:$0xff] %vm1005, %v986
        %1012 = vst.msk [vmem:[%s368 + $0x30] sm:$0xff] %vm1005, %v991
        %1013 = vst.msk [vmem:[%s368 + $0x38] sm:$0xff] %vm1005, %v994
        %1014 = vst.msk [vmem:[%s368 + $0x40] sm:$0xff] %vm1005, %v999
        %1015 = vst.msk [vmem:[%s368 + $0x48] sm:$0xff] %vm1005, %v1002
        %s1016 = smul.u32 10, %s24
        %p1017 = scmp.lt.s32.totalorder %s1016, 19
        %s1018 = scalar_select %p1017, %s1016, 19
        %s1019 = smul.addr %s1018, 8
        %s1020 = scalar_lea.vmem %s9, %s1019
        // Predicated region
        $region65: #{tpu_custom_call.1} parent=55 // pred_check
          %p1021 = pneg %p236
        $region66: #{tpu_custom_call.1} parent=55 // pred_check_branch
          %1023 = sbr.rel (%p1021) target = $region68
        $region67: #{tpu_custom_call.1} parent=55 // pred_region
          %s1024 = smul.u32 10, %s24
        $region68: #{tpu_custom_call.1} parent=55 // pred_fallthru
          _
      $region56: #{tpu_custom_call.1} parent=5 // pred_fallthru
        _
      %p1025 = scmp.le.s32.totalorder 2, %s19
      // Predicated region
      $region69: #{tpu_custom_call.1} parent=5 // pred_check
        %p1026 = pneg %p1025
      $region70: #{tpu_custom_call.1} parent=5 // pred_check_branch
        %1028 = sbr.rel (%p1026) target = $region72
      $region71: #{tpu_custom_call.1} parent=5 // pred_region
        %s1029 = ssub.s32 %s19, 2
        // Predicated region
        $region73: #{tpu_custom_call.1} parent=71 // pred_check
          %p1030 = pneg %p242
        $region74: #{tpu_custom_call.1} parent=71 // pred_check_branch
          %1032 = sbr.rel (%p1030) target = $region76
        $region75: #{tpu_custom_call.1} parent=71 // pred_region
          %s1033 = smul.u32 10, %s25
          %p1034 = scmp.lt.s32.totalorder %s1033, 19
          %s1035 = scalar_select %p1034, %s1033, 19
          %s1036 = smul.addr %s1035, 8
          %s1037 = scalar_lea.vmem %s9, %s1036
        $region76: #{tpu_custom_call.1} parent=71 // pred_fallthru
          _
      $region72: #{tpu_custom_call.1} parent=5 // pred_fallthru
        _
    $region6: #{tpu_custom_call.1} parent=1 // loop_footer
      %s23 = sadd.s32 1, %s19
    $region7: #{tpu_custom_call.1} parent=1 // loop_footer_branch
      %18 = sbr.rel target = $region3
    $region8: #{tpu_custom_call.1} parent=1 // loop_exit
      _
    %1038 = vsyncpa [#allocation3], 1
    %s1039 = scalar_lea.sflag [#allocation3], 1
    %1040 = vsyncpa %s1039, 1
    %1041 = vsyncpa [#allocation5], 1

</llo_original>
